<compile_context>
chip_gen: v5e
topology: v5e:2x2
jax: 0.10.0
libtpu: 0.0.40
codegen_flags: <defaults>
</compile_context>

<pallas_src>
import functools
import math

import jax
import jax.numpy as jnp
from jax.experimental import pallas as pl
from jax.experimental.pallas import tpu as pltpu


# ----------------------------- fused Pallas kernel -----------------------------

def _gat_block_kernel(dims, x_ref, mask_ref, oh_ref,
                      w0_ref, b0_ref, w1_ref, b1_ref, w2_ref, b2_ref,
                      wf_ref, bf_ref, out_ref):
    """Full GATBlock_MIX forward for one (graph, neighbor_graph) pair (one grid step).

    Layout conventions (built by the wrapper):
      * per-stage weight columns: [ Wh_o | Wh_n | a_src_o | a_dst_o | a_src_n | a_dst_n ]
      * mask_ref: additive attention mask, origin rows stacked over neighbor rows,
        shape [2N, N], 0 for edges/self-loops and -1e30 elsewhere.
      * inter-stage state: lane-concatenated [out_origin | out_neighbor], which is
        exactly the concat the fusion Linear expects.
    """
    F0, F1, F2, F3 = dims
    N = x_ref.shape[0]
    mask = mask_ref[...]                                            # [2N, N]

    def stage(h_in, w_ref, b_ref, fout, relu):
        # One MXU dot -> both branches' features and all attention projections.
        h_ext = jnp.dot(h_in, w_ref[...],
                        preferred_element_type=jnp.float32)         # [N, 2*fout + 4]
        h_pair = h_ext[:, :2 * fout]                                 # [N, 2*fout] = [h_o | h_n]
        a_src_o = h_ext[:, 2 * fout:2 * fout + 1]                    # [N, 1]
        a_dst_o = h_ext[:, 2 * fout + 1:2 * fout + 2]
        a_src_n = h_ext[:, 2 * fout + 2:2 * fout + 3]
        a_dst_n = h_ext[:, 2 * fout + 3:2 * fout + 4]

        # e[i, j] = a_dst[i] + a_src[j]; both branches stacked along sublanes.
        e_o = a_dst_o + jnp.transpose(a_src_o, (1, 0))               # [N, N]
        e_n = a_dst_n + jnp.transpose(a_src_n, (1, 0))               # [N, N]
        e = jnp.concatenate([e_o, e_n], axis=0)                      # [2N, N]
        e = jnp.where(e > 0, e, 0.2 * e) + mask                      # LeakyReLU(0.2) + mask
        e = e - jnp.max(e, axis=-1, keepdims=True)
        p = jnp.exp(e)                                               # masked entries -> exactly 0
        attn = p * pl.reciprocal(jnp.sum(p, axis=-1, keepdims=True), approx=False)

        # Single aggregation dot for both branches.
        agg = jnp.dot(attn, h_pair, preferred_element_type=jnp.float32)   # [2N, 2*fout]
        # columns < fout come from the origin branch (top rows), >= fout from neighbor (bottom rows)
        lane = jax.lax.broadcasted_iota(jnp.int32, (N, 2 * fout), 1)
        out = jnp.where(lane < fout, agg[:N, :], agg[N:, :]) + b_ref[...]  # [N, 2*fout]
        return jnp.maximum(out, 0.0) if relu else out

    h = stage(x_ref[...], w0_ref, b0_ref, F1, False)   # stage 0: no relu
    h = stage(h, w1_ref, b1_ref, F2, True)
    h = stage(h, w2_ref, b2_ref, F3, True)

    # Only the last fusion Linear contributes to the output (stages 0/1 fusion
    # results are overwritten and never used by the reference forward).
    fused = jnp.dot(h, wf_ref[...], preferred_element_type=jnp.float32) + bf_ref[...]

    # Global mean pool, still VMEM-resident.
    oh = oh_ref[...]                                                 # [G, N]
    counts = jnp.maximum(jnp.sum(oh, axis=-1, keepdims=True), 1.0)   # guard empty/padded graphs
    out_ref[...] = (jnp.dot(oh, fused, preferred_element_type=jnp.float32)
                    * pl.reciprocal(counts, approx=False))


# ----------------------------- wrapper -----------------------------------------

def _stage_params(po, pn, stacked_input):
    """Fused per-stage weight/bias.

    Column layout: [ Wh_o | Wh_n | a_src_o | a_dst_o | a_src_n | a_dst_n ].
    stacked_input=False (stage 0): both branches read the same x -> W: [Fin, 2*Fout+4].
    stacked_input=True  (stages 1,2): input is [out_o | out_n]   -> block-diag W: [2*Fin, 2*Fout+4].
    """
    w_o, w_n = po["w"], pn["w"]                            # [Fin, Fout]
    fin, fout = w_o.shape
    asrc_o, adst_o = w_o @ po["a_src"].T, w_o @ po["a_dst"].T   # [Fin, 1]
    asrc_n, adst_n = w_n @ pn["a_src"].T, w_n @ pn["a_dst"].T
    if not stacked_input:
        w = jnp.concatenate([w_o, w_n, asrc_o, adst_o, asrc_n, adst_n], axis=1)
    else:
        z = jnp.zeros((fin, fout), jnp.float32)
        zc = jnp.zeros((fin, 1), jnp.float32)
        top = jnp.concatenate([w_o, z, asrc_o, adst_o, zc, zc], axis=1)
        bot = jnp.concatenate([z, w_n, zc, zc, asrc_n, adst_n], axis=1)
        w = jnp.concatenate([top, bot], axis=0)
    b = jnp.concatenate([po["b"], pn["b"]], axis=1)         # [1, 2*Fout]
    return w.astype(jnp.float32), b.astype(jnp.float32)


def gat_block_mix_batched(params, x, mask, onehot):
    """Fused block for P stacked pairs in one pallas_call.

    x: [P, N, F0]  mask: [P, 2N, N] (additive)  onehot: [P, G, N]  ->  [P, G, F_last]
    """
    P, N, F0 = x.shape
    G = onehot.shape[1]
    dims = [F0] + [params["conv"][i]["w"].shape[1] for i in range(3)]
    F_last = dims[-1]

    flat_params = []
    for i in range(3):
        w, b = _stage_params(params["conv"][i], params["conv_nb"][i], stacked_input=(i > 0))
        flat_params += [w, b]
    flat_params += [params["fusion"][2]["w"], params["fusion"][2]["b"]]   # only live fusion

    def bspec(arr):      # per-pair batched array: squeeze the pair axis
        return pl.BlockSpec((pl.Squeezed(),) + arr.shape[1:], lambda p: (p, 0, 0))

    def pspec(arr):      # parameters shared across all pairs
        return pl.BlockSpec(arr.shape, lambda p: (0, 0))

    kernel = functools.partial(_gat_block_kernel, tuple(dims))
    return pl.pallas_call(
        kernel,
        out_shape=jax.ShapeDtypeStruct((P, G, F_last), jnp.float32),
        grid=(P,),
        in_specs=[bspec(x), bspec(mask), bspec(onehot)] + [pspec(a) for a in flat_params],
        out_specs=pl.BlockSpec((pl.Squeezed(), G, F_last), lambda p: (p, 0, 0)),
        compiler_params=pltpu.CompilerParams(
            dimension_semantics=("parallel",)),   # pairs shard across TCs on v7x
    )(x, mask, onehot, *flat_params)


def _pad_to(a, shape):
    return jnp.pad(a, [(0, t - s) for s, t in zip(a.shape, shape)])


def gat_model_mix_forward(params, graph_batchs, graph_neighbor_batchs):
    """Mirror of GATModel_MIX.forward: list of per-pair graph embeddings.

    Heterogeneous pair shapes are zero-padded to a common (sublane-aligned) size so
    everything runs as ONE pallas_call; padded nodes/graphs are neutralized by the
    additive mask and the zero rows of the pooling one-hot.
    """
    pairs = list(zip(graph_batchs, graph_neighbor_batchs))
    n_max = max(g["x"].shape[0] for g, _ in pairs)
    n_max = -(-n_max // 8) * 8                       # sublane-align padded node count
    g_max = max(g["batch_onehot"].shape[0] for g, _ in pairs)

    xs, masks, ohs, g_sizes = [], [], [], []
    for g, gn in pairs:
        adj_o = _pad_to(g["adj"], (n_max, n_max))
        adj_n = _pad_to(gn["adj"], (n_max, n_max))
        mask = jnp.concatenate(
            [jnp.where(adj_o > 0, 0.0, -1e30), jnp.where(adj_n > 0, 0.0, -1e30)],
            axis=0).astype(jnp.float32)              # [2*n_max, n_max] additive mask
        xs.append(_pad_to(g["x"], (n_max, g["x"].shape[1])))
        masks.append(mask)
        ohs.append(_pad_to(g["batch_onehot"], (g_max, n_max)))
        g_sizes.append(g["batch_onehot"].shape[0])

    emb = gat_block_mix_batched(params, jnp.stack(xs), jnp.stack(masks), jnp.stack(ohs))
    return [emb[i, :g_sizes[i]] for i in range(len(pairs))]


# ----------------------------- params ------------------------------------------

def init_params(key, layers_dim):
    """Deterministic glorot-ish init, matching GATConv / Linear parameter shapes."""
    def glorot(k, shape):
        fan_in, fan_out = shape[0], shape[-1]
        lim = math.sqrt(6.0 / (fan_in + fan_out))
        return jax.random.uniform(k, shape, jnp.float32, -lim, lim)

    params = {"conv": [], "conv_nb": [], "fusion": []}
    for i in range(3):
        fin, fout = layers_dim[i], layers_dim[i + 1]
        for name in ("conv", "conv_nb"):
            key, k1, k2, k3 = jax.random.split(key, 4)
            params[name].append(dict(
                w=glorot(k1, (fin, fout)),              # lin.weight^T
                a_src=glorot(k2, (1, fout)),            # att_src
                a_dst=glorot(k3, (1, fout)),            # att_dst
                b=jnp.zeros((1, fout), jnp.float32),    # bias
            ))
        key, k1 = jax.random.split(key)
        params["fusion"].append(dict(
            w=glorot(k1, (2 * fout, fout)),             # Linear(2*fout -> fout) weight^T
            b=jnp.zeros((1, fout), jnp.float32),
        ))
    return params


# ----------------------------- pure-JAX reference --------------------------------

def _ref_gat(x, p, adj, relu):
    h = x @ p["w"]
    a_s = jnp.sum(h * p["a_src"], -1, keepdims=True)
    a_d = jnp.sum(h * p["a_dst"], -1, keepdims=True)
    e = a_d + a_s.T
    e = jnp.where(e > 0, e, 0.2 * e)
    e = jnp.where(adj > 0, e, -1e30)
    e = e - jnp.max(e, -1, keepdims=True)
    pr = jnp.exp(e) * (adj > 0)
    attn = pr / jnp.sum(pr, -1, keepdims=True)
    out = attn @ h + p["b"]
    return jnp.maximum(out, 0.0) if relu else out


def _ref_block(params, x, adj, adj_nb, onehot):
    oo = _ref_gat(x, params["conv"][0], adj, False)
    on = _ref_gat(x, params["conv_nb"][0], adj_nb, False)
    out = jnp.concatenate([oo, on], -1) @ params["fusion"][0]["w"] + params["fusion"][0]["b"]
    for i in range(1, 3):
        oo = _ref_gat(oo, params["conv"][i], adj, True)
        on = _ref_gat(on, params["conv_nb"][i], adj_nb, True)
        out = jnp.concatenate([oo, on], -1) @ params["fusion"][i]["w"] + params["fusion"][i]["b"]
    return (onehot @ out) / jnp.sum(onehot, -1, keepdims=True)


# ----------------------------- data helpers --------------------------------------

def edges_to_adj(edge_index, num_nodes):
    """edge_index [2, E] (src, dst) -> dense [N_dst, N_src] mask with self-loops."""
    src, dst = edge_index[0], edge_index[1]
    adj = jnp.zeros((num_nodes, num_nodes), jnp.float32).at[dst, src].set(1.0)
    return jnp.maximum(adj, jnp.eye(num_nodes, dtype=jnp.float32))


def batch_to_onehot(batch, num_graphs):
    return (batch[None, :] == jnp.arange(num_graphs)[:, None]).astype(jnp.float32)


# ----------------------------- main -----------------------------------------------

if __name__ == "__main__":
    key = jax.random.PRNGKey(0)
    layers_dim = [8, 16, 16, 32]          # 3 GAT layers: 8 -> 16 -> 16 -> 32
    N = 16                                # 2 graphs of 8 nodes batched per pair
    G = 2
    P = 2                                 # two (graph, neighbor_graph) pairs
    nodes_per_graph = N // G

    key, kp = jax.random.split(key)
    params = init_params(kp, layers_dim)

    def ring_edges(stride):
        srcs, dsts = [], []
        for g in range(G):
            off = g * nodes_per_graph
            for i in range(nodes_per_graph):
                j = (i + stride) % nodes_per_graph
                srcs += [off + i, off + j]
                dsts += [off + j, off + i]
        return jnp.array([srcs, dsts], dtype=jnp.int32)

    batch = jnp.repeat(jnp.arange(G), nodes_per_graph)
    graphs, graphs_nb = [], []
    for p_idx in range(P):
        key, kx = jax.random.split(key)
        x = jax.random.normal(kx, (N, layers_dim[0]), jnp.float32)
        graphs.append({"x": x,
                       "adj": edges_to_adj(ring_edges(1 + p_idx), N),
                       "batch_onehot": batch_to_onehot(batch, G)})
        graphs_nb.append({"adj": edges_to_adj(ring_edges(2 + p_idx), N)})

    embeddings = gat_model_mix_forward(params, graphs, graphs_nb)
    embeddings = [jax.block_until_ready(e) for e in embeddings]

    # sanity-check every pair against a pure-JAX dense reference
    for (g, gn), emb in zip(zip(graphs, graphs_nb), embeddings):
        ref = _ref_block(params, g["x"], g["adj"], gn["adj"], g["batch_onehot"])
        assert emb.shape == (G, layers_dim[-1])
        err = float(jnp.max(jnp.abs(emb - ref)))
        assert jnp.allclose(emb, ref, atol=5e-4, rtol=5e-4), err

    # TODO(synk): self.dropout is defined in the PyTorch module but never applied in
    # forward(), so it is intentionally omitted here.
    print("KERNEL_OK")
</pallas_src>

<mosaic_0001>
module attributes {stable_mosaic.version = 11 : i64} {
  func.func @_gat_block_kernel(%arg0: i32, %arg1: memref<1x16x8xf32, #tpu.memory_space<vmem>>, %arg2: memref<1x32x16xf32, #tpu.memory_space<vmem>>, %arg3: memref<1x2x16xf32, #tpu.memory_space<vmem>>, %arg4: memref<8x36xf32, #tpu.memory_space<vmem>>, %arg5: memref<1x32xf32, #tpu.memory_space<vmem>>, %arg6: memref<32x36xf32, #tpu.memory_space<vmem>>, %arg7: memref<1x32xf32, #tpu.memory_space<vmem>>, %arg8: memref<32x68xf32, #tpu.memory_space<vmem>>, %arg9: memref<1x64xf32, #tpu.memory_space<vmem>>, %arg10: memref<64x32xf32, #tpu.memory_space<vmem>>, %arg11: memref<1x32xf32, #tpu.memory_space<vmem>>, %arg12: memref<1x2x32xf32, #tpu.memory_space<vmem>>) attributes {dimension_semantics = [#tpu.dimension_semantics<parallel>], iteration_bounds = array<i64: 2>, scalar_prefetch = 0 : i64, scratch_operands = 0 : i64, tpu.core_type = #tpu.core_type<tc>, window_params = [{transform_indices = @transform_0, window_bounds = array<i64: 1, 16, 8>}, {transform_indices = @transform_1, window_bounds = array<i64: 1, 32, 16>}, {transform_indices = @transform_2, window_bounds = array<i64: 1, 2, 16>}, {pipeline_mode = #tpu.pipeline_mode<synchronous>, transform_indices = @transform_3, window_bounds = array<i64: 8, 36>}, {pipeline_mode = #tpu.pipeline_mode<synchronous>, transform_indices = @transform_4, window_bounds = array<i64: 1, 32>}, {pipeline_mode = #tpu.pipeline_mode<synchronous>, transform_indices = @transform_5, window_bounds = array<i64: 32, 36>}, {pipeline_mode = #tpu.pipeline_mode<synchronous>, transform_indices = @transform_6, window_bounds = array<i64: 1, 32>}, {pipeline_mode = #tpu.pipeline_mode<synchronous>, transform_indices = @transform_7, window_bounds = array<i64: 32, 68>}, {pipeline_mode = #tpu.pipeline_mode<synchronous>, transform_indices = @transform_8, window_bounds = array<i64: 1, 64>}, {pipeline_mode = #tpu.pipeline_mode<synchronous>, transform_indices = @transform_9, window_bounds = array<i64: 64, 32>}, {pipeline_mode = #tpu.pipeline_mode<synchronous>, transform_indices = @transform_10, window_bounds = array<i64: 1, 32>}, {transform_indices = @transform_11, window_bounds = array<i64: 1, 2, 32>}]} {
    %c0 = arith.constant 0 : index
    %c0_0 = arith.constant 0 : index
    %c0_1 = arith.constant 0 : index
    %0 = vector.load %arg2[%c0, %c0_0, %c0_1] : memref<1x32x16xf32, #tpu.memory_space<vmem>>, vector<1x32x16xf32>
    %1 = vector.shape_cast %0 : vector<1x32x16xf32> to vector<32x16xf32>
    %c0_2 = arith.constant 0 : index
    %c0_3 = arith.constant 0 : index
    %c0_4 = arith.constant 0 : index
    %2 = vector.load %arg1[%c0_2, %c0_3, %c0_4] : memref<1x16x8xf32, #tpu.memory_space<vmem>>, vector<1x16x8xf32>
    %3 = vector.shape_cast %2 : vector<1x16x8xf32> to vector<16x8xf32>
    %c0_5 = arith.constant 0 : index
    %c0_6 = arith.constant 0 : index
    %4 = vector.load %arg4[%c0_5, %c0_6] : memref<8x36xf32, #tpu.memory_space<vmem>>, vector<8x36xf32>
    %cst = arith.constant dense<0.000000e+00> : vector<16x36xf32>
    %5 = tpu.matmul %3, %4, %cst {dimension_numbers = #tpu.dot_dimension_numbers<[1], [0], [0], [1], [0, 0, 1, 1], [], []>} : vector<16x8xf32>, vector<8x36xf32>, vector<16x36xf32> -> vector<16x36xf32>
    %6 = vector.extract_strided_slice %5 {offsets = [0, 0], sizes = [16, 32], strides = [1, 1]} : vector<16x36xf32> to vector<16x32xf32>
    %7 = vector.extract_strided_slice %5 {offsets = [0, 32], sizes = [16, 1], strides = [1, 1]} : vector<16x36xf32> to vector<16x1xf32>
    %8 = vector.extract_strided_slice %5 {offsets = [0, 33], sizes = [16, 1], strides = [1, 1]} : vector<16x36xf32> to vector<16x1xf32>
    %9 = vector.extract_strided_slice %5 {offsets = [0, 34], sizes = [16, 1], strides = [1, 1]} : vector<16x36xf32> to vector<16x1xf32>
    %10 = vector.extract_strided_slice %5 {offsets = [0, 35], sizes = [16, 1], strides = [1, 1]} : vector<16x36xf32> to vector<16x1xf32>
    %11 = tpu.transpose %7, [1, 0] : vector<16x1xf32> -> vector<1x16xf32>
    %12 = vector.broadcast %8 : vector<16x1xf32> to vector<16x16xf32>
    %13 = vector.broadcast %11 : vector<1x16xf32> to vector<16x16xf32>
    %14 = arith.addf %12, %13 : vector<16x16xf32>
    %15 = tpu.transpose %9, [1, 0] : vector<16x1xf32> -> vector<1x16xf32>
    %16 = vector.broadcast %10 : vector<16x1xf32> to vector<16x16xf32>
    %17 = vector.broadcast %15 : vector<1x16xf32> to vector<16x16xf32>
    %18 = arith.addf %16, %17 : vector<16x16xf32>
    %19 = tpu.concatenate %14, %18 in 0 : vector<16x16xf32>, vector<16x16xf32> -> vector<32x16xf32>
    %cst_7 = arith.constant 0.000000e+00 : f32
    %20 = vector.broadcast %cst_7 : f32 to vector<32x16xf32>
    %21 = arith.cmpf ogt, %19, %20 : vector<32x16xf32>
    %cst_8 = arith.constant 2.000000e-01 : f32
    %22 = vector.broadcast %cst_8 : f32 to vector<32x16xf32>
    %23 = arith.mulf %22, %19 : vector<32x16xf32>
    %24 = arith.select %21, %19, %23 : vector<32x16xi1>, vector<32x16xf32>
    %25 = arith.addf %24, %1 : vector<32x16xf32>
    %cst_9 = arith.constant dense<0xFF800000> : vector<32xf32>
    %26 = vector.multi_reduction <maximumf>, %25, %cst_9 [1] : vector<32x16xf32> to vector<32xf32>
    %27 = vector.shape_cast %26 : vector<32xf32> to vector<32x1xf32>
    %28 = vector.broadcast %27 : vector<32x1xf32> to vector<32x16xf32>
    %29 = arith.subf %25, %28 : vector<32x16xf32>
    %30 = math.exp %29 : vector<32x16xf32>
    %cst_10 = arith.constant dense<0.000000e+00> : vector<32xf32>
    %31 = vector.multi_reduction <add>, %30, %cst_10 [1] : vector<32x16xf32> to vector<32xf32>
    %32 = vector.shape_cast %31 : vector<32xf32> to vector<32x1xf32>
    %33 = tpu.reciprocal %32 : vector<32x1xf32> -> vector<32x1xf32>
    %34 = vector.broadcast %33 : vector<32x1xf32> to vector<32x16xf32>
    %35 = arith.mulf %30, %34 : vector<32x16xf32>
    %cst_11 = arith.constant dense<0.000000e+00> : vector<32x32xf32>
    %36 = tpu.matmul %35, %6, %cst_11 {dimension_numbers = #tpu.dot_dimension_numbers<[1], [0], [0], [1], [0, 0, 1, 1], [], []>} : vector<32x16xf32>, vector<16x32xf32>, vector<32x32xf32> -> vector<32x32xf32>
    %37 = tpu.iota {dimensions = array<i32: 1>} : vector<16x32xi32>
    %c16_i32 = arith.constant 16 : i32
    %38 = vector.broadcast %c16_i32 : i32 to vector<16x32xi32>
    %39 = arith.cmpi slt, %37, %38 : vector<16x32xi32>
    %40 = vector.extract_strided_slice %36 {offsets = [0, 0], sizes = [16, 32], strides = [1, 1]} : vector<32x32xf32> to vector<16x32xf32>
    %41 = vector.extract_strided_slice %36 {offsets = [16, 0], sizes = [16, 32], strides = [1, 1]} : vector<32x32xf32> to vector<16x32xf32>
    %42 = arith.select %39, %40, %41 : vector<16x32xi1>, vector<16x32xf32>
    %c0_12 = arith.constant 0 : index
    %c0_13 = arith.constant 0 : index
    %43 = vector.load %arg5[%c0_12, %c0_13] : memref<1x32xf32, #tpu.memory_space<vmem>>, vector<1x32xf32>
    %44 = vector.broadcast %43 : vector<1x32xf32> to vector<16x32xf32>
    %45 = arith.addf %42, %44 : vector<16x32xf32>
    %c0_14 = arith.constant 0 : index
    %c0_15 = arith.constant 0 : index
    %46 = vector.load %arg6[%c0_14, %c0_15] : memref<32x36xf32, #tpu.memory_space<vmem>>, vector<32x36xf32>
    %cst_16 = arith.constant dense<0.000000e+00> : vector<16x36xf32>
    %47 = tpu.matmul %45, %46, %cst_16 {dimension_numbers = #tpu.dot_dimension_numbers<[1], [0], [0], [1], [0, 0, 1, 1], [], []>} : vector<16x32xf32>, vector<32x36xf32>, vector<16x36xf32> -> vector<16x36xf32>
    %48 = vector.extract_strided_slice %47 {offsets = [0, 0], sizes = [16, 32], strides = [1, 1]} : vector<16x36xf32> to vector<16x32xf32>
    %49 = vector.extract_strided_slice %47 {offsets = [0, 32], sizes = [16, 1], strides = [1, 1]} : vector<16x36xf32> to vector<16x1xf32>
    %50 = vector.extract_strided_slice %47 {offsets = [0, 33], sizes = [16, 1], strides = [1, 1]} : vector<16x36xf32> to vector<16x1xf32>
    %51 = vector.extract_strided_slice %47 {offsets = [0, 34], sizes = [16, 1], strides = [1, 1]} : vector<16x36xf32> to vector<16x1xf32>
    %52 = vector.extract_strided_slice %47 {offsets = [0, 35], sizes = [16, 1], strides = [1, 1]} : vector<16x36xf32> to vector<16x1xf32>
    %53 = tpu.transpose %49, [1, 0] : vector<16x1xf32> -> vector<1x16xf32>
    %54 = vector.broadcast %50 : vector<16x1xf32> to vector<16x16xf32>
    %55 = vector.broadcast %53 : vector<1x16xf32> to vector<16x16xf32>
    %56 = arith.addf %54, %55 : vector<16x16xf32>
    %57 = tpu.transpose %51, [1, 0] : vector<16x1xf32> -> vector<1x16xf32>
    %58 = vector.broadcast %52 : vector<16x1xf32> to vector<16x16xf32>
    %59 = vector.broadcast %57 : vector<1x16xf32> to vector<16x16xf32>
    %60 = arith.addf %58, %59 : vector<16x16xf32>
    %61 = tpu.concatenate %56, %60 in 0 : vector<16x16xf32>, vector<16x16xf32> -> vector<32x16xf32>
    %cst_17 = arith.constant 0.000000e+00 : f32
    %62 = vector.broadcast %cst_17 : f32 to vector<32x16xf32>
    %63 = arith.cmpf ogt, %61, %62 : vector<32x16xf32>
    %cst_18 = arith.constant 2.000000e-01 : f32
    %64 = vector.broadcast %cst_18 : f32 to vector<32x16xf32>
    %65 = arith.mulf %64, %61 : vector<32x16xf32>
    %66 = arith.select %63, %61, %65 : vector<32x16xi1>, vector<32x16xf32>
    %67 = arith.addf %66, %1 : vector<32x16xf32>
    %cst_19 = arith.constant dense<0xFF800000> : vector<32xf32>
    %68 = vector.multi_reduction <maximumf>, %67, %cst_19 [1] : vector<32x16xf32> to vector<32xf32>
    %69 = vector.shape_cast %68 : vector<32xf32> to vector<32x1xf32>
    %70 = vector.broadcast %69 : vector<32x1xf32> to vector<32x16xf32>
    %71 = arith.subf %67, %70 : vector<32x16xf32>
    %72 = math.exp %71 : vector<32x16xf32>
    %cst_20 = arith.constant dense<0.000000e+00> : vector<32xf32>
    %73 = vector.multi_reduction <add>, %72, %cst_20 [1] : vector<32x16xf32> to vector<32xf32>
    %74 = vector.shape_cast %73 : vector<32xf32> to vector<32x1xf32>
    %75 = tpu.reciprocal %74 : vector<32x1xf32> -> vector<32x1xf32>
    %76 = vector.broadcast %75 : vector<32x1xf32> to vector<32x16xf32>
    %77 = arith.mulf %72, %76 : vector<32x16xf32>
    %cst_21 = arith.constant dense<0.000000e+00> : vector<32x32xf32>
    %78 = tpu.matmul %77, %48, %cst_21 {dimension_numbers = #tpu.dot_dimension_numbers<[1], [0], [0], [1], [0, 0, 1, 1], [], []>} : vector<32x16xf32>, vector<16x32xf32>, vector<32x32xf32> -> vector<32x32xf32>
    %79 = tpu.iota {dimensions = array<i32: 1>} : vector<16x32xi32>
    %c16_i32_22 = arith.constant 16 : i32
    %80 = vector.broadcast %c16_i32_22 : i32 to vector<16x32xi32>
    %81 = arith.cmpi slt, %79, %80 : vector<16x32xi32>
    %82 = vector.extract_strided_slice %78 {offsets = [0, 0], sizes = [16, 32], strides = [1, 1]} : vector<32x32xf32> to vector<16x32xf32>
    %83 = vector.extract_strided_slice %78 {offsets = [16, 0], sizes = [16, 32], strides = [1, 1]} : vector<32x32xf32> to vector<16x32xf32>
    %84 = arith.select %81, %82, %83 : vector<16x32xi1>, vector<16x32xf32>
    %c0_23 = arith.constant 0 : index
    %c0_24 = arith.constant 0 : index
    %85 = vector.load %arg7[%c0_23, %c0_24] : memref<1x32xf32, #tpu.memory_space<vmem>>, vector<1x32xf32>
    %86 = vector.broadcast %85 : vector<1x32xf32> to vector<16x32xf32>
    %87 = arith.addf %84, %86 : vector<16x32xf32>
    %cst_25 = arith.constant 0.000000e+00 : f32
    %88 = vector.broadcast %cst_25 : f32 to vector<16x32xf32>
    %89 = arith.maximumf %87, %88 : vector<16x32xf32>
    %c0_26 = arith.constant 0 : index
    %c0_27 = arith.constant 0 : index
    %90 = vector.load %arg8[%c0_26, %c0_27] : memref<32x68xf32, #tpu.memory_space<vmem>>, vector<32x68xf32>
    %cst_28 = arith.constant dense<0.000000e+00> : vector<16x68xf32>
    %91 = tpu.matmul %89, %90, %cst_28 {dimension_numbers = #tpu.dot_dimension_numbers<[1], [0], [0], [1], [0, 0, 1, 1], [], []>} : vector<16x32xf32>, vector<32x68xf32>, vector<16x68xf32> -> vector<16x68xf32>
    %92 = vector.extract_strided_slice %91 {offsets = [0, 0], sizes = [16, 64], strides = [1, 1]} : vector<16x68xf32> to vector<16x64xf32>
    %93 = vector.extract_strided_slice %91 {offsets = [0, 64], sizes = [16, 1], strides = [1, 1]} : vector<16x68xf32> to vector<16x1xf32>
    %94 = vector.extract_strided_slice %91 {offsets = [0, 65], sizes = [16, 1], strides = [1, 1]} : vector<16x68xf32> to vector<16x1xf32>
    %95 = vector.extract_strided_slice %91 {offsets = [0, 66], sizes = [16, 1], strides = [1, 1]} : vector<16x68xf32> to vector<16x1xf32>
    %96 = vector.extract_strided_slice %91 {offsets = [0, 67], sizes = [16, 1], strides = [1, 1]} : vector<16x68xf32> to vector<16x1xf32>
    %97 = tpu.transpose %93, [1, 0] : vector<16x1xf32> -> vector<1x16xf32>
    %98 = vector.broadcast %94 : vector<16x1xf32> to vector<16x16xf32>
    %99 = vector.broadcast %97 : vector<1x16xf32> to vector<16x16xf32>
    %100 = arith.addf %98, %99 : vector<16x16xf32>
    %101 = tpu.transpose %95, [1, 0] : vector<16x1xf32> -> vector<1x16xf32>
    %102 = vector.broadcast %96 : vector<16x1xf32> to vector<16x16xf32>
    %103 = vector.broadcast %101 : vector<1x16xf32> to vector<16x16xf32>
    %104 = arith.addf %102, %103 : vector<16x16xf32>
    %105 = tpu.concatenate %100, %104 in 0 : vector<16x16xf32>, vector<16x16xf32> -> vector<32x16xf32>
    %cst_29 = arith.constant 0.000000e+00 : f32
    %106 = vector.broadcast %cst_29 : f32 to vector<32x16xf32>
    %107 = arith.cmpf ogt, %105, %106 : vector<32x16xf32>
    %cst_30 = arith.constant 2.000000e-01 : f32
    %108 = vector.broadcast %cst_30 : f32 to vector<32x16xf32>
    %109 = arith.mulf %108, %105 : vector<32x16xf32>
    %110 = arith.select %107, %105, %109 : vector<32x16xi1>, vector<32x16xf32>
    %111 = arith.addf %110, %1 : vector<32x16xf32>
    %cst_31 = arith.constant dense<0xFF800000> : vector<32xf32>
    %112 = vector.multi_reduction <maximumf>, %111, %cst_31 [1] : vector<32x16xf32> to vector<32xf32>
    %113 = vector.shape_cast %112 : vector<32xf32> to vector<32x1xf32>
    %114 = vector.broadcast %113 : vector<32x1xf32> to vector<32x16xf32>
    %115 = arith.subf %111, %114 : vector<32x16xf32>
    %116 = math.exp %115 : vector<32x16xf32>
    %cst_32 = arith.constant dense<0.000000e+00> : vector<32xf32>
    %117 = vector.multi_reduction <add>, %116, %cst_32 [1] : vector<32x16xf32> to vector<32xf32>
    %118 = vector.shape_cast %117 : vector<32xf32> to vector<32x1xf32>
    %119 = tpu.reciprocal %118 : vector<32x1xf32> -> vector<32x1xf32>
    %120 = vector.broadcast %119 : vector<32x1xf32> to vector<32x16xf32>
    %121 = arith.mulf %116, %120 : vector<32x16xf32>
    %cst_33 = arith.constant dense<0.000000e+00> : vector<32x64xf32>
    %122 = tpu.matmul %121, %92, %cst_33 {dimension_numbers = #tpu.dot_dimension_numbers<[1], [0], [0], [1], [0, 0, 1, 1], [], []>} : vector<32x16xf32>, vector<16x64xf32>, vector<32x64xf32> -> vector<32x64xf32>
    %123 = tpu.iota {dimensions = array<i32: 1>} : vector<16x64xi32>
    %c32_i32 = arith.constant 32 : i32
    %124 = vector.broadcast %c32_i32 : i32 to vector<16x64xi32>
    %125 = arith.cmpi slt, %123, %124 : vector<16x64xi32>
    %126 = vector.extract_strided_slice %122 {offsets = [0, 0], sizes = [16, 64], strides = [1, 1]} : vector<32x64xf32> to vector<16x64xf32>
    %127 = vector.extract_strided_slice %122 {offsets = [16, 0], sizes = [16, 64], strides = [1, 1]} : vector<32x64xf32> to vector<16x64xf32>
    %128 = arith.select %125, %126, %127 : vector<16x64xi1>, vector<16x64xf32>
    %c0_34 = arith.constant 0 : index
    %c0_35 = arith.constant 0 : index
    %129 = vector.load %arg9[%c0_34, %c0_35] : memref<1x64xf32, #tpu.memory_space<vmem>>, vector<1x64xf32>
    %130 = vector.broadcast %129 : vector<1x64xf32> to vector<16x64xf32>
    %131 = arith.addf %128, %130 : vector<16x64xf32>
    %cst_36 = arith.constant 0.000000e+00 : f32
    %132 = vector.broadcast %cst_36 : f32 to vector<16x64xf32>
    %133 = arith.maximumf %131, %132 : vector<16x64xf32>
    %c0_37 = arith.constant 0 : index
    %c0_38 = arith.constant 0 : index
    %134 = vector.load %arg10[%c0_37, %c0_38] : memref<64x32xf32, #tpu.memory_space<vmem>>, vector<64x32xf32>
    %cst_39 = arith.constant dense<0.000000e+00> : vector<16x32xf32>
    %135 = tpu.matmul %133, %134, %cst_39 {dimension_numbers = #tpu.dot_dimension_numbers<[1], [0], [0], [1], [0, 0, 1, 1], [], []>} : vector<16x64xf32>, vector<64x32xf32>, vector<16x32xf32> -> vector<16x32xf32>
    %c0_40 = arith.constant 0 : index
    %c0_41 = arith.constant 0 : index
    %136 = vector.load %arg11[%c0_40, %c0_41] : memref<1x32xf32, #tpu.memory_space<vmem>>, vector<1x32xf32>
    %137 = vector.broadcast %136 : vector<1x32xf32> to vector<16x32xf32>
    %138 = arith.addf %135, %137 : vector<16x32xf32>
    %c0_42 = arith.constant 0 : index
    %c0_43 = arith.constant 0 : index
    %c0_44 = arith.constant 0 : index
    %139 = vector.load %arg3[%c0_42, %c0_43, %c0_44] : memref<1x2x16xf32, #tpu.memory_space<vmem>>, vector<1x2x16xf32>
    %140 = vector.shape_cast %139 : vector<1x2x16xf32> to vector<2x16xf32>
    %cst_45 = arith.constant dense<0.000000e+00> : vector<2xf32>
    %141 = vector.multi_reduction <add>, %140, %cst_45 [1] : vector<2x16xf32> to vector<2xf32>
    %142 = vector.shape_cast %141 : vector<2xf32> to vector<2x1xf32>
    %cst_46 = arith.constant 1.000000e+00 : f32
    %143 = vector.broadcast %cst_46 : f32 to vector<2x1xf32>
    %144 = arith.maximumf %142, %143 : vector<2x1xf32>
    %cst_47 = arith.constant dense<0.000000e+00> : vector<2x32xf32>
    %145 = tpu.matmul %140, %138, %cst_47 {dimension_numbers = #tpu.dot_dimension_numbers<[1], [0], [0], [1], [0, 0, 1, 1], [], []>} : vector<2x16xf32>, vector<16x32xf32>, vector<2x32xf32> -> vector<2x32xf32>
    %146 = tpu.reciprocal %144 : vector<2x1xf32> -> vector<2x1xf32>
    %147 = vector.broadcast %146 : vector<2x1xf32> to vector<2x32xf32>
    %148 = arith.mulf %145, %147 : vector<2x32xf32>
    %c0_48 = arith.constant 0 : index
    %c0_49 = arith.constant 0 : index
    %c0_50 = arith.constant 0 : index
    %149 = vector.load %arg12[%c0_48, %c0_49, %c0_50] : memref<1x2x32xf32, #tpu.memory_space<vmem>>, vector<1x2x32xf32>
    %150 = vector.shape_cast %149 : vector<1x2x32xf32> to vector<2x32xf32>
    %151 = vector.shape_cast %148 : vector<2x32xf32> to vector<1x2x32xf32>
    tpu.vector_store %arg12[%c0_48, %c0_49, %c0_50], %151 {strides = array<i32>} : memref<1x2x32xf32, #tpu.memory_space<vmem>>, vector<1x2x32xf32>,
    return
  }
  func.func @transform_0(%arg0: i32) -> (i32, i32, i32) {
    %c0_i32 = arith.constant 0 : i32
    %c0_i32_0 = arith.constant 0 : i32
    %c0_i32_1 = arith.constant 0 : i32
    return %arg0, %c0_i32, %c0_i32_0 : i32, i32, i32
  }
  func.func @transform_1(%arg0: i32) -> (i32, i32, i32) {
    %c0_i32 = arith.constant 0 : i32
    %c0_i32_0 = arith.constant 0 : i32
    %c0_i32_1 = arith.constant 0 : i32
    return %arg0, %c0_i32, %c0_i32_0 : i32, i32, i32
  }
  func.func @transform_2(%arg0: i32) -> (i32, i32, i32) {
    %c0_i32 = arith.constant 0 : i32
    %c0_i32_0 = arith.constant 0 : i32
    %c0_i32_1 = arith.constant 0 : i32
    return %arg0, %c0_i32, %c0_i32_0 : i32, i32, i32
  }
  func.func @transform_3(%arg0: i32) -> (i32, i32) {
    %c0_i32 = arith.constant 0 : i32
    %c0_i32_0 = arith.constant 0 : i32
    %c0_i32_1 = arith.constant 0 : i32
    return %c0_i32, %c0_i32_0 : i32, i32
  }
  func.func @transform_4(%arg0: i32) -> (i32, i32) {
    %c0_i32 = arith.constant 0 : i32
    %c0_i32_0 = arith.constant 0 : i32
    %c0_i32_1 = arith.constant 0 : i32
    return %c0_i32, %c0_i32_0 : i32, i32
  }
  func.func @transform_5(%arg0: i32) -> (i32, i32) {
    %c0_i32 = arith.constant 0 : i32
    %c0_i32_0 = arith.constant 0 : i32
    %c0_i32_1 = arith.constant 0 : i32
    return %c0_i32, %c0_i32_0 : i32, i32
  }
  func.func @transform_6(%arg0: i32) -> (i32, i32) {
    %c0_i32 = arith.constant 0 : i32
    %c0_i32_0 = arith.constant 0 : i32
    %c0_i32_1 = arith.constant 0 : i32
    return %c0_i32, %c0_i32_0 : i32, i32
  }
  func.func @transform_7(%arg0: i32) -> (i32, i32) {
    %c0_i32 = arith.constant 0 : i32
    %c0_i32_0 = arith.constant 0 : i32
    %c0_i32_1 = arith.constant 0 : i32
    return %c0_i32, %c0_i32_0 : i32, i32
  }
  func.func @transform_8(%arg0: i32) -> (i32, i32) {
    %c0_i32 = arith.constant 0 : i32
    %c0_i32_0 = arith.constant 0 : i32
    %c0_i32_1 = arith.constant 0 : i32
    return %c0_i32, %c0_i32_0 : i32, i32
  }
  func.func @transform_9(%arg0: i32) -> (i32, i32) {
    %c0_i32 = arith.constant 0 : i32
    %c0_i32_0 = arith.constant 0 : i32
    %c0_i32_1 = arith.constant 0 : i32
    return %c0_i32, %c0_i32_0 : i32, i32
  }
  func.func @transform_10(%arg0: i32) -> (i32, i32) {
    %c0_i32 = arith.constant 0 : i32
    %c0_i32_0 = arith.constant 0 : i32
    %c0_i32_1 = arith.constant 0 : i32
    return %c0_i32, %c0_i32_0 : i32, i32
  }
  func.func @transform_11(%arg0: i32) -> (i32, i32, i32) {
    %c0_i32 = arith.constant 0 : i32
    %c0_i32_0 = arith.constant 0 : i32
    %c0_i32_1 = arith.constant 0 : i32
    return %arg0, %c0_i32, %c0_i32_0 : i32, i32, i32
  }
}

</mosaic_0001>

<llo_original>
// kernel: tpu_custom_call.1
$region0: #{tpu_custom_call.1}
  #allocation0 [shape = 'u32[]', space=smem, size = 0x4, offset = 0x4, fixed_abs, tag = 'smem constant byte address 0x4 - core index']
  #allocation1 [shape = 'u32[72,128]{1,0:T(1,128)}', space=vmem, size = 0x9000, scoped, tag = 'internal scratch']
  %s0 = inlined_call_operand.vmem [shape: f32[2,16,8], index: 0, kind: input, shape index: {}]
  %s1 = inlined_call_operand.vmem [shape: f32[2,32,16], index: 1, kind: input, shape index: {}]
  %s2 = inlined_call_operand.vmem [shape: f32[2,2,16], index: 2, kind: input, shape index: {}]
  %s3 = inlined_call_operand.vmem [shape: f32[8,36], index: 3, kind: input, shape index: {}]
  %s4 = inlined_call_operand.vmem [shape: f32[1,32], index: 4, kind: input, shape index: {}]
  %s5 = inlined_call_operand.vmem [shape: f32[32,36], index: 5, kind: input, shape index: {}]
  %s6 = inlined_call_operand.vmem [shape: f32[1,32], index: 6, kind: input, shape index: {}]
  %s7 = inlined_call_operand.vmem [shape: f32[32,68], index: 7, kind: input, shape index: {}]
  %s8 = inlined_call_operand.vmem [shape: f32[1,64], index: 8, kind: input, shape index: {}]
  %s9 = inlined_call_operand.vmem [shape: f32[64,32], index: 9, kind: input, shape index: {}]
  %s10 = inlined_call_operand.vmem [shape: f32[1,32], index: 10, kind: input, shape index: {}]
  %s11 = inlined_call_operand.hbm [shape: f32[2,2,32], index: 11, kind: output, shape index: {}]
  %s12 = sld [smem:[#allocation0]]
  $region77: #{tpu_custom_call.1} parent=0
    _
  %s14 = ssub.s32 1, %s12
  %s15 = scalar_select 0, %s14, %s12
  $region1: #{tpu_custom_call.1} parent=0
    #allocation2 [shape = 'u8[2048]{0}', space=vmem, size = 0x800, scoped, tag = 'output window, operand 0']
    #allocation3 [shape = 's32[2]{0}', space=sflag, size = 0x8, scoped, tag = 'scoped memory for tpu_custom_call.1']
    %16 = vsyncpa [#allocation3], 0
    %s17 = scalar_lea.sflag [#allocation3], 1
    %18 = vsyncpa %s17, 0
    loop: start=0, step=1, limit=4
    $region2: #{tpu_custom_call.1} parent=1 // loop_pre_header
      _
    $region3: #{tpu_custom_call.1} parent=1 // loop_header
      %s20 = sphi 0, %s24
      %p21 = scmp.ge.s32.totalorder %s20, 4
      %s30 = sphi 0, %s32
      %s33 = sphi 0, %s30
      %s34 = sphi 0, %s33
      %s50 = sphi 0, %s34
      %s56 = sphi 0, %s58
      %s59 = sphi 0, %s56
      %s60 = sphi 0, %s59
      %s76 = sphi 0, %s60
      %s82 = sphi 0, %s84
      %s85 = sphi 0, %s82
      %s86 = sphi 0, %s85
      %s102 = sphi 0, %s86
      %s106 = sphi 0, %s106
      %s108 = sphi 0, %s106
      %s109 = sphi 0, %s108
      %s123 = sphi 0, %s109
      %s127 = sphi 0, %s127
      %s129 = sphi 0, %s127
      %s130 = sphi 0, %s129
      %s144 = sphi 0, %s130
      %s148 = sphi 0, %s148
      %s150 = sphi 0, %s148
      %s151 = sphi 0, %s150
      %s165 = sphi 0, %s151
      %s169 = sphi 0, %s169
      %s171 = sphi 0, %s169
      %s172 = sphi 0, %s171
      %s186 = sphi 0, %s172
      %s190 = sphi 0, %s190
      %s192 = sphi 0, %s190
      %s193 = sphi 0, %s192
      %s207 = sphi 0, %s193
      %s211 = sphi 0, %s211
      %s213 = sphi 0, %s211
      %s214 = sphi 0, %s213
      %s228 = sphi 0, %s214
      %s232 = sphi 0, %s232
      %s234 = sphi 0, %s232
      %s235 = sphi 0, %s234
      %s249 = sphi 0, %s235
      %s253 = sphi 0, %s253
      %s255 = sphi 0, %s253
      %s256 = sphi 0, %s255
      %s270 = sphi 0, %s256
      %s276 = sphi 0, %s278
      %s279 = sphi 0, %s276
      %s280 = sphi 0, %s279
      %s296 = sphi 0, %s280
    $region4: #{tpu_custom_call.1} parent=1 // loop_header_branch
      %23 = sbr.rel (%p21) target = $region8
    $region5: #{tpu_custom_call.1} parent=1 // loop_body
      %s25 = ssub.s32 %s20, 1
      %s26 = ssub.s32 %s20, 2
      %s27 = sadd.s32 %s20, 1
      %s28 = ssub.s32 %s20, %s27
      %p29 = scmp.eq.s32.totalorder %s28, 0
      %s31 = sadd.s32 %s30, 1
      %s32 = scalar_select %p29, %s30, %s31
      %p35 = pneg %p29
      %p36 = scmp.eq.s32.totalorder %s20, 1
      %p37 = por %p35, %p36
      %p38 = scmp.ne.s32.totalorder %s30, %s33
      %p39 = scmp.eq.s32.totalorder %s20, 0
      %p40 = por %p38, %p39
      %p41 = scmp.ne.s32.totalorder %s30, %s33
      %p42 = scmp.eq.s32.totalorder %s25, 1
      %p43 = por %p41, %p42
      %p44 = scmp.ne.s32.totalorder %s33, %s34
      %p45 = scmp.eq.s32.totalorder %s25, 0
      %p46 = por %p44, %p45
      %p47 = scmp.ne.s32.totalorder %s33, %s34
      %p48 = scmp.eq.s32.totalorder %s26, 1
      %p49 = por %p47, %p48
      %p51 = scmp.ne.s32.totalorder %s34, %s50
      %p52 = scmp.eq.s32.totalorder %s26, 0
      %p53 = por %p51, %p52
      %s54 = ssub.s32 %s20, %s27
      %p55 = scmp.eq.s32.totalorder %s54, 0
      %s57 = sadd.s32 %s56, 1
      %s58 = scalar_select %p55, %s56, %s57
      %p61 = pneg %p55
      %p62 = scmp.eq.s32.totalorder %s20, 1
      %p63 = por %p61, %p62
      %p64 = scmp.ne.s32.totalorder %s56, %s59
      %p65 = scmp.eq.s32.totalorder %s20, 0
      %p66 = por %p64, %p65
      %p67 = scmp.ne.s32.totalorder %s56, %s59
      %p68 = scmp.eq.s32.totalorder %s25, 1
      %p69 = por %p67, %p68
      %p70 = scmp.ne.s32.totalorder %s59, %s60
      %p71 = scmp.eq.s32.totalorder %s25, 0
      %p72 = por %p70, %p71
      %p73 = scmp.ne.s32.totalorder %s59, %s60
      %p74 = scmp.eq.s32.totalorder %s26, 1
      %p75 = por %p73, %p74
      %p77 = scmp.ne.s32.totalorder %s60, %s76
      %p78 = scmp.eq.s32.totalorder %s26, 0
      %p79 = por %p77, %p78
      %s80 = ssub.s32 %s20, %s27
      %p81 = scmp.eq.s32.totalorder %s80, 0
      %s83 = sadd.s32 %s82, 1
      %s84 = scalar_select %p81, %s82, %s83
      %p87 = pneg %p81
      %p88 = scmp.eq.s32.totalorder %s20, 1
      %p89 = por %p87, %p88
      %p90 = scmp.ne.s32.totalorder %s82, %s85
      %p91 = scmp.eq.s32.totalorder %s20, 0
      %p92 = por %p90, %p91
      %p93 = scmp.ne.s32.totalorder %s82, %s85
      %p94 = scmp.eq.s32.totalorder %s25, 1
      %p95 = por %p93, %p94
      %p96 = scmp.ne.s32.totalorder %s85, %s86
      %p97 = scmp.eq.s32.totalorder %s25, 0
      %p98 = por %p96, %p97
      %p99 = scmp.ne.s32.totalorder %s85, %s86
      %p100 = scmp.eq.s32.totalorder %s26, 1
      %p101 = por %p99, %p100
      %p103 = scmp.ne.s32.totalorder %s86, %s102
      %p104 = scmp.eq.s32.totalorder %s26, 0
      %p105 = por %p103, %p104
      %s107 = sadd.s32 %s106, 1
      %p110 = scmp.eq.s32.totalorder %s20, 1
      %p111 = scmp.ne.s32.totalorder %s106, %s108
      %p112 = scmp.eq.s32.totalorder %s20, 0
      %p113 = por %p111, %p112
      %p114 = scmp.ne.s32.totalorder %s106, %s108
      %p115 = scmp.eq.s32.totalorder %s25, 1
      %p116 = por %p114, %p115
      %p117 = scmp.ne.s32.totalorder %s108, %s109
      %p118 = scmp.eq.s32.totalorder %s25, 0
      %p119 = por %p117, %p118
      %p120 = scmp.ne.s32.totalorder %s108, %s109
      %p121 = scmp.eq.s32.totalorder %s26, 1
      %p122 = por %p120, %p121
      %p124 = scmp.ne.s32.totalorder %s109, %s123
      %p125 = scmp.eq.s32.totalorder %s26, 0
      %p126 = por %p124, %p125
      %s128 = sadd.s32 %s127, 1
      %p131 = scmp.eq.s32.totalorder %s20, 1
      %p132 = scmp.ne.s32.totalorder %s127, %s129
      %p133 = scmp.eq.s32.totalorder %s20, 0
      %p134 = por %p132, %p133
      %p135 = scmp.ne.s32.totalorder %s127, %s129
      %p136 = scmp.eq.s32.totalorder %s25, 1
      %p137 = por %p135, %p136
      %p138 = scmp.ne.s32.totalorder %s129, %s130
      %p139 = scmp.eq.s32.totalorder %s25, 0
      %p140 = por %p138, %p139
      %p141 = scmp.ne.s32.totalorder %s129, %s130
      %p142 = scmp.eq.s32.totalorder %s26, 1
      %p143 = por %p141, %p142
      %p145 = scmp.ne.s32.totalorder %s130, %s144
      %p146 = scmp.eq.s32.totalorder %s26, 0
      %p147 = por %p145, %p146
      %s149 = sadd.s32 %s148, 1
      %p152 = scmp.eq.s32.totalorder %s20, 1
      %p153 = scmp.ne.s32.totalorder %s148, %s150
      %p154 = scmp.eq.s32.totalorder %s20, 0
      %p155 = por %p153, %p154
      %p156 = scmp.ne.s32.totalorder %s148, %s150
      %p157 = scmp.eq.s32.totalorder %s25, 1
      %p158 = por %p156, %p157
      %p159 = scmp.ne.s32.totalorder %s150, %s151
      %p160 = scmp.eq.s32.totalorder %s25, 0
      %p161 = por %p159, %p160
      %p162 = scmp.ne.s32.totalorder %s150, %s151
      %p163 = scmp.eq.s32.totalorder %s26, 1
      %p164 = por %p162, %p163
      %p166 = scmp.ne.s32.totalorder %s151, %s165
      %p167 = scmp.eq.s32.totalorder %s26, 0
      %p168 = por %p166, %p167
      %s170 = sadd.s32 %s169, 1
      %p173 = scmp.eq.s32.totalorder %s20, 1
      %p174 = scmp.ne.s32.totalorder %s169, %s171
      %p175 = scmp.eq.s32.totalorder %s20, 0
      %p176 = por %p174, %p175
      %p177 = scmp.ne.s32.totalorder %s169, %s171
      %p178 = scmp.eq.s32.totalorder %s25, 1
      %p179 = por %p177, %p178
      %p180 = scmp.ne.s32.totalorder %s171, %s172
      %p181 = scmp.eq.s32.totalorder %s25, 0
      %p182 = por %p180, %p181
      %p183 = scmp.ne.s32.totalorder %s171, %s172
      %p184 = scmp.eq.s32.totalorder %s26, 1
      %p185 = por %p183, %p184
      %p187 = scmp.ne.s32.totalorder %s172, %s186
      %p188 = scmp.eq.s32.totalorder %s26, 0
      %p189 = por %p187, %p188
      %s191 = sadd.s32 %s190, 1
      %p194 = scmp.eq.s32.totalorder %s20, 1
      %p195 = scmp.ne.s32.totalorder %s190, %s192
      %p196 = scmp.eq.s32.totalorder %s20, 0
      %p197 = por %p195, %p196
      %p198 = scmp.ne.s32.totalorder %s190, %s192
      %p199 = scmp.eq.s32.totalorder %s25, 1
      %p200 = por %p198, %p199
      %p201 = scmp.ne.s32.totalorder %s192, %s193
      %p202 = scmp.eq.s32.totalorder %s25, 0
      %p203 = por %p201, %p202
      %p204 = scmp.ne.s32.totalorder %s192, %s193
      %p205 = scmp.eq.s32.totalorder %s26, 1
      %p206 = por %p204, %p205
      %p208 = scmp.ne.s32.totalorder %s193, %s207
      %p209 = scmp.eq.s32.totalorder %s26, 0
      %p210 = por %p208, %p209
      %s212 = sadd.s32 %s211, 1
      %p215 = scmp.eq.s32.totalorder %s20, 1
      %p216 = scmp.ne.s32.totalorder %s211, %s213
      %p217 = scmp.eq.s32.totalorder %s20, 0
      %p218 = por %p216, %p217
      %p219 = scmp.ne.s32.totalorder %s211, %s213
      %p220 = scmp.eq.s32.totalorder %s25, 1
      %p221 = por %p219, %p220
      %p222 = scmp.ne.s32.totalorder %s213, %s214
      %p223 = scmp.eq.s32.totalorder %s25, 0
      %p224 = por %p222, %p223
      %p225 = scmp.ne.s32.totalorder %s213, %s214
      %p226 = scmp.eq.s32.totalorder %s26, 1
      %p227 = por %p225, %p226
      %p229 = scmp.ne.s32.totalorder %s214, %s228
      %p230 = scmp.eq.s32.totalorder %s26, 0
      %p231 = por %p229, %p230
      %s233 = sadd.s32 %s232, 1
      %p236 = scmp.eq.s32.totalorder %s20, 1
      %p237 = scmp.ne.s32.totalorder %s232, %s234
      %p238 = scmp.eq.s32.totalorder %s20, 0
      %p239 = por %p237, %p238
      %p240 = scmp.ne.s32.totalorder %s232, %s234
      %p241 = scmp.eq.s32.totalorder %s25, 1
      %p242 = por %p240, %p241
      %p243 = scmp.ne.s32.totalorder %s234, %s235
      %p244 = scmp.eq.s32.totalorder %s25, 0
      %p245 = por %p243, %p244
      %p246 = scmp.ne.s32.totalorder %s234, %s235
      %p247 = scmp.eq.s32.totalorder %s26, 1
      %p248 = por %p246, %p247
      %p250 = scmp.ne.s32.totalorder %s235, %s249
      %p251 = scmp.eq.s32.totalorder %s26, 0
      %p252 = por %p250, %p251
      %s254 = sadd.s32 %s253, 1
      %p257 = scmp.eq.s32.totalorder %s20, 1
      %p258 = scmp.ne.s32.totalorder %s253, %s255
      %p259 = scmp.eq.s32.totalorder %s20, 0
      %p260 = por %p258, %p259
      %p261 = scmp.ne.s32.totalorder %s253, %s255
      %p262 = scmp.eq.s32.totalorder %s25, 1
      %p263 = por %p261, %p262
      %p264 = scmp.ne.s32.totalorder %s255, %s256
      %p265 = scmp.eq.s32.totalorder %s25, 0
      %p266 = por %p264, %p265
      %p267 = scmp.ne.s32.totalorder %s255, %s256
      %p268 = scmp.eq.s32.totalorder %s26, 1
      %p269 = por %p267, %p268
      %p271 = scmp.ne.s32.totalorder %s256, %s270
      %p272 = scmp.eq.s32.totalorder %s26, 0
      %p273 = por %p271, %p272
      %s274 = ssub.s32 %s20, %s27
      %p275 = scmp.eq.s32.totalorder %s274, 0
      %s277 = sadd.s32 %s276, 1
      %s278 = scalar_select %p275, %s276, %s277
      %p281 = pneg %p275
      %p282 = scmp.eq.s32.totalorder %s20, 1
      %p283 = por %p281, %p282
      %p284 = scmp.ne.s32.totalorder %s276, %s279
      %p285 = scmp.eq.s32.totalorder %s20, 0
      %p286 = por %p284, %p285
      %p287 = scmp.ne.s32.totalorder %s276, %s279
      %p288 = scmp.eq.s32.totalorder %s25, 1
      %p289 = por %p287, %p288
      %p290 = scmp.ne.s32.totalorder %s279, %s280
      %p291 = scmp.eq.s32.totalorder %s25, 0
      %p292 = por %p290, %p291
      %p293 = scmp.ne.s32.totalorder %s279, %s280
      %p294 = scmp.eq.s32.totalorder %s26, 1
      %p295 = por %p293, %p294
      %p297 = scmp.ne.s32.totalorder %s280, %s296
      %p298 = scmp.eq.s32.totalorder %s26, 0
      %p299 = por %p297, %p298
      %p300 = scmp.le.s32.totalorder 1, %s20
      %p301 = scmp.lt.s32.totalorder %s20, 3
      %p302 = pnand %p300, %p301
      %p303 = pneg %p302
      // Predicated region
      $region9: #{tpu_custom_call.1} parent=5 // pred_check
        _
      $region10: #{tpu_custom_call.1} parent=5 // pred_check_branch
        %305 = sbr.rel (%p302) target = $region12
      $region11: #{tpu_custom_call.1} parent=5 // pred_region
        %s306 = ssub.s32 %s20, 1
        // Predicated region
        $region13: #{tpu_custom_call.1} parent=11 // pred_check
          %p307 = pneg %p119
        $region14: #{tpu_custom_call.1} parent=11 // pred_check_branch
          %309 = sbr.rel (%p307) target = $region16
        $region15: #{tpu_custom_call.1} parent=11 // pred_region
          _
        $region16: #{tpu_custom_call.1} parent=11 // pred_fallthru
          _
        // Predicated region
        $region17: #{tpu_custom_call.1} parent=11 // pred_check
          %p310 = pneg %p140
        $region18: #{tpu_custom_call.1} parent=11 // pred_check_branch
          %312 = sbr.rel (%p310) target = $region20
        $region19: #{tpu_custom_call.1} parent=11 // pred_region
          _
        $region20: #{tpu_custom_call.1} parent=11 // pred_fallthru
          _
        // Predicated region
        $region21: #{tpu_custom_call.1} parent=11 // pred_check
          %p313 = pneg %p161
        $region22: #{tpu_custom_call.1} parent=11 // pred_check_branch
          %315 = sbr.rel (%p313) target = $region24
        $region23: #{tpu_custom_call.1} parent=11 // pred_region
          _
        $region24: #{tpu_custom_call.1} parent=11 // pred_fallthru
          _
        // Predicated region
        $region25: #{tpu_custom_call.1} parent=11 // pred_check
          %p316 = pneg %p182
        $region26: #{tpu_custom_call.1} parent=11 // pred_check_branch
          %318 = sbr.rel (%p316) target = $region28
        $region27: #{tpu_custom_call.1} parent=11 // pred_region
          _
        $region28: #{tpu_custom_call.1} parent=11 // pred_fallthru
          _
        // Predicated region
        $region29: #{tpu_custom_call.1} parent=11 // pred_check
          %p319 = pneg %p203
        $region30: #{tpu_custom_call.1} parent=11 // pred_check_branch
          %321 = sbr.rel (%p319) target = $region32
        $region31: #{tpu_custom_call.1} parent=11 // pred_region
          _
        $region32: #{tpu_custom_call.1} parent=11 // pred_fallthru
          _
        // Predicated region
        $region33: #{tpu_custom_call.1} parent=11 // pred_check
          %p322 = pneg %p224
        $region34: #{tpu_custom_call.1} parent=11 // pred_check_branch
          %324 = sbr.rel (%p322) target = $region36
        $region35: #{tpu_custom_call.1} parent=11 // pred_region
          _
        $region36: #{tpu_custom_call.1} parent=11 // pred_fallthru
          _
        // Predicated region
        $region37: #{tpu_custom_call.1} parent=11 // pred_check
          %p325 = pneg %p245
        $region38: #{tpu_custom_call.1} parent=11 // pred_check_branch
          %327 = sbr.rel (%p325) target = $region40
        $region39: #{tpu_custom_call.1} parent=11 // pred_region
          _
        $region40: #{tpu_custom_call.1} parent=11 // pred_fallthru
          _
        // Predicated region
        $region41: #{tpu_custom_call.1} parent=11 // pred_check
          %p328 = pneg %p266
        $region42: #{tpu_custom_call.1} parent=11 // pred_check_branch
          %330 = sbr.rel (%p328) target = $region44
        $region43: #{tpu_custom_call.1} parent=11 // pred_region
          _
        $region44: #{tpu_custom_call.1} parent=11 // pred_fallthru
          _
      $region12: #{tpu_custom_call.1} parent=5 // pred_fallthru
        _
      %p331 = scmp.lt.s32.totalorder %s20, 2
      // Predicated region
      $region45: #{tpu_custom_call.1} parent=5 // pred_check
        %p332 = pneg %p331
      $region46: #{tpu_custom_call.1} parent=5 // pred_check_branch
        %334 = sbr.rel (%p332) target = $region48
      $region47: #{tpu_custom_call.1} parent=5 // pred_region
        // Predicated region
        $region49: #{tpu_custom_call.1} parent=47 // pred_check
          %p335 = pneg %p40
        $region50: #{tpu_custom_call.1} parent=47 // pred_check_branch
          %337 = sbr.rel (%p335) target = $region52
        $region51: #{tpu_custom_call.1} parent=47 // pred_region
          %p338 = scmp.lt.s32.totalorder %s20, 1
          %s339 = scalar_select %p338, %s20, 1
          %s340 = smul.addr %s339, 2
          %s341 = smul.addr %s340, 8
          %s342 = scalar_lea.vmem %s0, %s341
        $region52: #{tpu_custom_call.1} parent=47 // pred_fallthru
          _
        // Predicated region
        $region53: #{tpu_custom_call.1} parent=47 // pred_check
          %p343 = pneg %p66
        $region54: #{tpu_custom_call.1} parent=47 // pred_check_branch
          %345 = sbr.rel (%p343) target = $region56
        $region55: #{tpu_custom_call.1} parent=47 // pred_region
          %p346 = scmp.lt.s32.totalorder %s20, 1
          %s347 = scalar_select %p346, %s20, 1
          %s348 = smul.addr %s347, 4
          %s349 = smul.addr %s348, 8
          %s350 = scalar_lea.vmem %s1, %s349
        $region56: #{tpu_custom_call.1} parent=47 // pred_fallthru
          _
        // Predicated region
        $region57: #{tpu_custom_call.1} parent=47 // pred_check
          %p351 = pneg %p92
        $region58: #{tpu_custom_call.1} parent=47 // pred_check_branch
          %353 = sbr.rel (%p351) target = $region60
        $region59: #{tpu_custom_call.1} parent=47 // pred_region
          %p354 = scmp.lt.s32.totalorder %s20, 1
          %s355 = scalar_select %p354, %s20, 1
          %s356 = smul.addr %s355, 2
          %s357 = scalar_lea.vmem %s2, %s356
        $region60: #{tpu_custom_call.1} parent=47 // pred_fallthru
          _
      $region48: #{tpu_custom_call.1} parent=5 // pred_fallthru
        _
      %p358 = scmp.le.s32.totalorder 1, %s20
      %p359 = scmp.lt.s32.totalorder %s20, 3
      %p360 = pnand %p358, %p359
      %p361 = pneg %p360
      // Predicated region
      $region61: #{tpu_custom_call.1} parent=5 // pred_check
        _
      $region62: #{tpu_custom_call.1} parent=5 // pred_check_branch
        %363 = sbr.rel (%p360) target = $region64
      $region63: #{tpu_custom_call.1} parent=5 // pred_region
        %s364 = ssub.s32 %s20, 1
        %p365 = scmp.lt.s32.totalorder %s25, 1
        %s366 = scalar_select %p365, %s25, 1
        %s367 = smul.addr %s366, 2
        %s368 = smul.addr %s367, 8
        %s369 = scalar_lea.vmem %s0, %s368
        %p370 = pneg %p46
        %p371 = pneg %p43
        %p372 = scmp.lt.s32.totalorder %s25, 1
        %s373 = scalar_select %p372, %s25, 1
        %s374 = smul.addr %s373, 4
        %s375 = smul.addr %s374, 8
        %s376 = scalar_lea.vmem %s1, %s375
        %p377 = pneg %p72
        %p378 = pneg %p69
        %p379 = scmp.lt.s32.totalorder %s25, 1
        %s380 = scalar_select %p379, %s25, 1
        %s381 = smul.addr %s380, 2
        %s382 = scalar_lea.vmem %s2, %s381
        %p383 = pneg %p98
        %p384 = pneg %p95
        %p385 = pneg %p119
        %p386 = pneg %p116
        %p387 = pneg %p140
        %p388 = pneg %p137
        %p389 = pneg %p161
        %p390 = pneg %p158
        %p391 = pneg %p182
        %p392 = pneg %p179
        %p393 = pneg %p203
        %p394 = pneg %p200
        %p395 = pneg %p224
        %p396 = pneg %p221
        %p397 = pneg %p245
        %p398 = pneg %p242
        %p399 = pneg %p266
        %p400 = pneg %p263
        %p401 = pneg %p292
        %p402 = pneg %p289
        %s403 = sand.u32 %s279, 1
        %s404 = scalar_lea.sflag [#allocation3], %s403
        %s405 = sand.u32 %s279, 1
        %s406 = smul.addr %s405, 2
        %s407 = scalar_lea.vmem [#allocation2], %s406
        %p408 = scmp.lt.s32.totalorder %s25, 1
        %s409 = scalar_select %p408, %s25, 1
        %s410 = smul.addr %s409, 2
        %s411 = smul.addr %s410, 8
        %s412 = scalar_lea.vmem %s0, %s411
        %p413 = scmp.lt.s32.totalorder %s25, 1
        %s414 = scalar_select %p413, %s25, 1
        %s415 = smul.addr %s414, 4
        %s416 = smul.addr %s415, 8
        %s417 = scalar_lea.vmem %s1, %s416
        %p418 = scmp.lt.s32.totalorder %s25, 1
        %s419 = scalar_select %p418, %s25, 1
        %s420 = smul.addr %s419, 2
        %s421 = scalar_lea.vmem %s2, %s420
        %v422 = vld [vmem:[%s417] sm:$0xff]
        %v423 = vld [vmem:[%s417 + $0x8] sm:$0xff]
        %v424 = vld [vmem:[%s417 + $0x10] sm:$0xff]
        %v425 = vld [vmem:[%s417 + $0x18] sm:$0xff]
        %v426 = vld [vmem:[%s412] sm:$0xff]
        %v427 = vld [vmem:[%s412 + $0x8] sm:$0xff]
        %v428 = vld [vmem:[%s3] sm:$0xff]
        %vm429 = vcmask 64512
        %v431 = vsel %vm429, %v426, 0
        %v434 = vsel %vm429, %v427, 0
        %436 = vmatpush.msra.mxu0 0.0
        %437 = vmatpush.msra.mxu0 0.0
        %438 = vmatpush.msra.mxu0 0.0
        %439 = vmatpush.msra.mxu0 0.0
        %440 = vmatpush.msra.mxu0 0.0
        %441 = vmatpush.msra.mxu0 0.0
        %442 = vmatpush.msra.mxu0 0.0
        %443 = vmatpush.msra.mxu0 0.0
        %444 = vmatpush.msra.mxu0 0.0
        %445 = vmatpush.msra.mxu0 0.0
        %446 = vmatpush.msra.mxu0 0.0
        %447 = vmatpush.msra.mxu0 0.0
        %448 = vmatpush.msra.mxu0 0.0
        %449 = vmatpush.msra.mxu0 0.0
        %450 = vmatpush.msra.mxu0 0.0
        %451 = vmatpush.msra.mxu0 %v428
        %452 = vmatmul.f32.gmra.mxu0 %v431
        %v453 = vpop.f32.mrf.mxu0
        %v454 = vadd.f32 0.0, %v453
        %455 = vmatmul.f32.gmra.mxu0 %v434
        %v456 = vpop.f32.mrf.mxu0
        %v457 = vadd.f32 0.0, %v456
        %458 = vdwg.mxu0
        %461 = vrot.lane.b32.xlu0 %v454, 96
        %v462 = vpop.permute.xlu0 %461
        %463 = vrot.lane.b32.xlu0 %v457, 96
        %v464 = vpop.permute.xlu0 %463
        %467 = vxpose.xlu0.b32.start [1/16] %v462, 128
        %468 = vxpose.xlu0.b32.cont [2/16] %v464, 128
        %469 = vxpose.xlu0.b32.cont [3/16] 0.0, 128
        %470 = vxpose.xlu0.b32.cont [4/16] 0.0, 128
        %471 = vxpose.xlu0.b32.cont [5/16] 0.0, 128
        %472 = vxpose.xlu0.b32.cont [6/16] 0.0, 128
        %473 = vxpose.xlu0.b32.cont [7/16] 0.0, 128
        %474 = vxpose.xlu0.b32.cont [8/16] 0.0, 128
        %475 = vxpose.xlu0.b32.cont [9/16] 0.0, 128
        %476 = vxpose.xlu0.b32.cont [10/16] 0.0, 128
        %477 = vxpose.xlu0.b32.cont [11/16] 0.0, 128
        %478 = vxpose.xlu0.b32.cont [12/16] 0.0, 128
        %479 = vxpose.xlu0.b32.cont [13/16] 0.0, 128
        %480 = vxpose.xlu0.b32.cont [14/16] 0.0, 128
        %481 = vxpose.xlu0.b32.cont [15/16] 0.0, 128
        %482 = vxpose.xlu0.b32.end [16/16] 0.0, 128
        %v483 = vpop.trf.xlu0
        %v484 = vpop.trf.xlu0
        %v485 = vpop.trf.xlu0
        %v486 = vpop.trf.xlu0
        %v487 = vpop.trf.xlu0
        %v488 = vpop.trf.xlu0
        %v489 = vpop.trf.xlu0
        %v490 = vpop.trf.xlu0
        %v491 = vpop.trf.xlu0
        %v492 = vpop.trf.xlu0
        %v493 = vpop.trf.xlu0
        %v494 = vpop.trf.xlu0
        %v495 = vpop.trf.xlu0
        %v496 = vpop.trf.xlu0
        %v497 = vpop.trf.xlu0
        %v498 = vpop.trf.xlu0
        %499 = vset.pattern.permute.xlu0 33
        %500 = vperm.xlu0 %499, %v454
        %v501 = vpop.permute.xlu0 %500
        %503 = vset.pattern.permute.xlu0 33
        %504 = vperm.xlu0 %503, %v457
        %v505 = vpop.permute.xlu0 %504
        %v507 = vperm.slane %v483, 0
        %v508 = vadd.f32 %v501, %v507
        %v509 = vadd.f32 %v505, %v507
        %510 = vrot.lane.b32.xlu0 %v454, 94
        %v511 = vpop.permute.xlu0 %510
        %512 = vrot.lane.b32.xlu0 %v457, 94
        %v513 = vpop.permute.xlu0 %512
        %516 = vxpose.xlu0.b32.start [1/16] %v511, 128
        %517 = vxpose.xlu0.b32.cont [2/16] %v513, 128
        %518 = vxpose.xlu0.b32.cont [3/16] 0.0, 128
        %519 = vxpose.xlu0.b32.cont [4/16] 0.0, 128
        %520 = vxpose.xlu0.b32.cont [5/16] 0.0, 128
        %521 = vxpose.xlu0.b32.cont [6/16] 0.0, 128
        %522 = vxpose.xlu0.b32.cont [7/16] 0.0, 128
        %523 = vxpose.xlu0.b32.cont [8/16] 0.0, 128
        %524 = vxpose.xlu0.b32.cont [9/16] 0.0, 128
        %525 = vxpose.xlu0.b32.cont [10/16] 0.0, 128
        %526 = vxpose.xlu0.b32.cont [11/16] 0.0, 128
        %527 = vxpose.xlu0.b32.cont [12/16] 0.0, 128
        %528 = vxpose.xlu0.b32.cont [13/16] 0.0, 128
        %529 = vxpose.xlu0.b32.cont [14/16] 0.0, 128
        %530 = vxpose.xlu0.b32.cont [15/16] 0.0, 128
        %531 = vxpose.xlu0.b32.end [16/16] 0.0, 128
        %v532 = vpop.trf.xlu0
        %v533 = vpop.trf.xlu0
        %v534 = vpop.trf.xlu0
        %v535 = vpop.trf.xlu0
        %v536 = vpop.trf.xlu0
        %v537 = vpop.trf.xlu0
        %v538 = vpop.trf.xlu0
        %v539 = vpop.trf.xlu0
        %v540 = vpop.trf.xlu0
        %v541 = vpop.trf.xlu0
        %v542 = vpop.trf.xlu0
        %v543 = vpop.trf.xlu0
        %v544 = vpop.trf.xlu0
        %v545 = vpop.trf.xlu0
        %v546 = vpop.trf.xlu0
        %v547 = vpop.trf.xlu0
        %548 = vset.pattern.permute.xlu0 35
        %549 = vperm.xlu0 %548, %v454
        %v550 = vpop.permute.xlu0 %549
        %552 = vset.pattern.permute.xlu0 35
        %553 = vperm.xlu0 %552, %v457
        %v554 = vpop.permute.xlu0 %553
        %v556 = vperm.slane %v532, 0
        %v557 = vadd.f32 %v550, %v556
        %v558 = vadd.f32 %v554, %v556
        %vm559 = vcmp.gt.f32.partialorder %v508, 0.0
        %vm560 = vcmp.gt.f32.partialorder %v509, 0.0
        %vm561 = vcmp.gt.f32.partialorder %v557, 0.0
        %vm562 = vcmp.gt.f32.partialorder %v558, 0.0
        %v563 = vmul.f32 %v508, 0.2
        %v564 = vmul.f32 %v509, 0.2
        %v565 = vmul.f32 %v557, 0.2
        %v566 = vmul.f32 %v558, 0.2
        %v567 = vsel %vm559, %v508, %v563
        %v568 = vsel %vm560, %v509, %v564
        %v569 = vsel %vm561, %v557, %v565
        %v570 = vsel %vm562, %v558, %v566
        %v571 = vadd.f32 %v567, %v422
        %v572 = vadd.f32 %v568, %v423
        %v573 = vadd.f32 %v569, %v424
        %v574 = vadd.f32 %v570, %v425
        %vm575 = vcmask 130048
        %v576 = vsel %vm575, %v571, -inf
        %577 = vmax.xlane.f32.xlu0 %v576
        %v578 = vpop.xlane.xlu0 %577
        %v579 = vsel %vm575, %v572, -inf
        %580 = vmax.xlane.f32.xlu0 %v579
        %v581 = vpop.xlane.xlu0 %580
        %v582 = vsel %vm575, %v573, -inf
        %583 = vmax.xlane.f32.xlu0 %v582
        %v584 = vpop.xlane.xlu0 %583
        %v585 = vsel %vm575, %v574, -inf
        %586 = vmax.xlane.f32.xlu0 %v585
        %v587 = vpop.xlane.xlu0 %586
        %v588 = vsub.f32 %v571, %v578
        %v589 = vsub.f32 %v572, %v581
        %v590 = vsub.f32 %v573, %v584
        %v591 = vsub.f32 %v574, %v587
        %v592 = vmul.f32 %v588, 1.442695
        %v593 = vpow.pop %v592
        %v594 = vmul.f32 %v589, 1.442695
        %v595 = vpow.pop %v594
        %v596 = vmul.f32 %v590, 1.442695
        %v597 = vpow.pop %v596
        %v598 = vmul.f32 %v591, 1.442695
        %v599 = vpow.pop %v598
        %v600 = vsel %vm575, %v593, 0.0
        %601 = vadd.xlane.f32.xlu0 %v600
        %v602 = vpop.xlane.xlu0 %601
        %v603 = vsel %vm575, %v595, 0.0
        %604 = vadd.xlane.f32.xlu0 %v603
        %v605 = vpop.xlane.xlu0 %604
        %v606 = vsel %vm575, %v597, 0.0
        %607 = vadd.xlane.f32.xlu0 %v606
        %v608 = vpop.xlane.xlu0 %607
        %v609 = vsel %vm575, %v599, 0.0
        %610 = vadd.xlane.f32.xlu0 %v609
        %v611 = vpop.xlane.xlu0 %610
        %v612 = vrcp.pop %v602
        %v613 = vmul.f32 %v602, %v612
        %v614 = vsub.f32 1.0, %v613
        %v615 = vmul.f32 %v612, %v614
        %v616 = vadd.f32 %v612, %v615
        %vm617 = vweird.f32 %v602
        %vm618 = vweird.f32 %v612
        %vm619 = vmor %vm617, %vm618
        %v620 = vsel %vm619, %v612, %v616
        %v621 = vand.u32 2147483647, %v602
        %vm622 = vcmp.eq.f32.partialorder %v621, 8.507059e+37
        %v623 = vand.u32 %v602, 2147483648
        %v624 = vor.u32 1.1754944e-38, %v623
        %v625 = vsel %vm622, %v624, %v620
        %v626 = vrcp.pop %v605
        %v627 = vmul.f32 %v605, %v626
        %v628 = vsub.f32 1.0, %v627
        %v629 = vmul.f32 %v626, %v628
        %v630 = vadd.f32 %v626, %v629
        %vm631 = vweird.f32 %v605
        %vm632 = vweird.f32 %v626
        %vm633 = vmor %vm631, %vm632
        %v634 = vsel %vm633, %v626, %v630
        %v635 = vand.u32 2147483647, %v605
        %vm636 = vcmp.eq.f32.partialorder %v635, 8.507059e+37
        %v637 = vand.u32 %v605, 2147483648
        %v638 = vor.u32 1.1754944e-38, %v637
        %v639 = vsel %vm636, %v638, %v634
        %v640 = vrcp.pop %v608
        %v641 = vmul.f32 %v608, %v640
        %v642 = vsub.f32 1.0, %v641
        %v643 = vmul.f32 %v640, %v642
        %v644 = vadd.f32 %v640, %v643
        %vm645 = vweird.f32 %v608
        %vm646 = vweird.f32 %v640
        %vm647 = vmor %vm645, %vm646
        %v648 = vsel %vm647, %v640, %v644
        %v649 = vand.u32 2147483647, %v608
        %vm650 = vcmp.eq.f32.partialorder %v649, 8.507059e+37
        %v651 = vand.u32 %v608, 2147483648
        %v652 = vor.u32 1.1754944e-38, %v651
        %v653 = vsel %vm650, %v652, %v648
        %v654 = vrcp.pop %v611
        %v655 = vmul.f32 %v611, %v654
        %v656 = vsub.f32 1.0, %v655
        %v657 = vmul.f32 %v654, %v656
        %v658 = vadd.f32 %v654, %v657
        %vm659 = vweird.f32 %v611
        %vm660 = vweird.f32 %v654
        %vm661 = vmor %vm659, %vm660
        %v662 = vsel %vm661, %v654, %v658
        %v663 = vand.u32 2147483647, %v611
        %vm664 = vcmp.eq.f32.partialorder %v663, 8.507059e+37
        %v665 = vand.u32 %v611, 2147483648
        %v666 = vor.u32 1.1754944e-38, %v665
        %v667 = vsel %vm664, %v666, %v662
        %v668 = vmul.f32 %v593, %v625
        %v669 = vmul.f32 %v595, %v639
        %v670 = vmul.f32 %v597, %v653
        %v671 = vmul.f32 %v599, %v667
        %v673 = vsel %vm575, %v668, 0
        %v676 = vsel %vm575, %v669, 0
        %v679 = vsel %vm575, %v670, 0
        %v682 = vsel %vm575, %v671, 0
        %684 = vmatpush.msra.mxu0 0.0
        %685 = vmatpush.msra.mxu0 0.0
        %686 = vmatpush.msra.mxu0 0.0
        %687 = vmatpush.msra.mxu0 0.0
        %688 = vmatpush.msra.mxu0 0.0
        %689 = vmatpush.msra.mxu0 0.0
        %690 = vmatpush.msra.mxu0 0.0
        %691 = vmatpush.msra.mxu0 0.0
        %692 = vmatpush.msra.mxu0 0.0
        %693 = vmatpush.msra.mxu0 0.0
        %694 = vmatpush.msra.mxu0 0.0
        %695 = vmatpush.msra.mxu0 0.0
        %696 = vmatpush.msra.mxu0 0.0
        %697 = vmatpush.msra.mxu0 0.0
        %698 = vmatpush.msra.mxu0 %v457
        %699 = vmatpush.msra.mxu0 %v454
        %700 = vmatmul.f32.gmra.mxu0 %v673
        %v701 = vpop.f32.mrf.mxu0
        %v702 = vadd.f32 0.0, %v701
        %703 = vmatmul.f32.gmra.mxu0 %v676
        %v704 = vpop.f32.mrf.mxu0
        %v705 = vadd.f32 0.0, %v704
        %706 = vmatmul.f32.gmra.mxu0 %v679
        %v707 = vpop.f32.mrf.mxu0
        %v708 = vadd.f32 0.0, %v707
        %709 = vmatmul.f32.gmra.mxu0 %v682
        %v710 = vpop.f32.mrf.mxu0
        %v711 = vadd.f32 0.0, %v710
        %712 = vdwg.mxu0
        %v713 = vlaneseq
        %v714 = vand.u32 %v713, 127
        %vm715 = vcmp.lt.s32.totalorder %v714, 16
        %v716 = vsel %vm715, %v702, %v708
        %v717 = vsel %vm715, %v705, %v711
        %v718 = vld [vmem:[%s4] sm:$0x1]
        %v720 = vperm.slane %v718, 0
        %v722 = vadd.f32 %v716, %v720
        %v723 = vadd.f32 %v717, %v720
        %v724 = vld [vmem:[%s5] sm:$0xff]
        %v725 = vld [vmem:[%s5 + $0x8] sm:$0xff]
        %v726 = vld [vmem:[%s5 + $0x10] sm:$0xff]
        %v727 = vld [vmem:[%s5 + $0x18] sm:$0xff]
        %vm728 = vcmask 261120
        %v730 = vsel %vm728, %v722, 0
        %v733 = vsel %vm728, %v723, 0
        %735 = vmatpush.msra.mxu0 0.0
        %736 = vmatpush.msra.mxu0 0.0
        %737 = vmatpush.msra.mxu0 0.0
        %738 = vmatpush.msra.mxu0 0.0
        %739 = vmatpush.msra.mxu0 0.0
        %740 = vmatpush.msra.mxu0 0.0
        %741 = vmatpush.msra.mxu0 0.0
        %742 = vmatpush.msra.mxu0 0.0
        %743 = vmatpush.msra.mxu0 0.0
        %744 = vmatpush.msra.mxu0 0.0
        %745 = vmatpush.msra.mxu0 0.0
        %746 = vmatpush.msra.mxu0 0.0
        %747 = vmatpush.msra.mxu0 %v727
        %748 = vmatpush.msra.mxu0 %v726
        %749 = vmatpush.msra.mxu0 %v725
        %750 = vmatpush.msra.mxu0 %v724
        %751 = vmatmul.f32.gmra.mxu0 %v730
        %v752 = vpop.f32.mrf.mxu0
        %v753 = vadd.f32 0.0, %v752
        %754 = vmatmul.f32.gmra.mxu0 %v733
        %v755 = vpop.f32.mrf.mxu0
        %v756 = vadd.f32 0.0, %v755
        %757 = vdwg.mxu0
        %760 = vrot.lane.b32.xlu0 %v753, 96
        %v761 = vpop.permute.xlu0 %760
        %762 = vrot.lane.b32.xlu0 %v756, 96
        %v763 = vpop.permute.xlu0 %762
        %766 = vxpose.xlu0.b32.start [1/16] %v761, 128
        %767 = vxpose.xlu0.b32.cont [2/16] %v763, 128
        %768 = vxpose.xlu0.b32.cont [3/16] 0.0, 128
        %769 = vxpose.xlu0.b32.cont [4/16] 0.0, 128
        %770 = vxpose.xlu0.b32.cont [5/16] 0.0, 128
        %771 = vxpose.xlu0.b32.cont [6/16] 0.0, 128
        %772 = vxpose.xlu0.b32.cont [7/16] 0.0, 128
        %773 = vxpose.xlu0.b32.cont [8/16] 0.0, 128
        %774 = vxpose.xlu0.b32.cont [9/16] 0.0, 128
        %775 = vxpose.xlu0.b32.cont [10/16] 0.0, 128
        %776 = vxpose.xlu0.b32.cont [11/16] 0.0, 128
        %777 = vxpose.xlu0.b32.cont [12/16] 0.0, 128
        %778 = vxpose.xlu0.b32.cont [13/16] 0.0, 128
        %779 = vxpose.xlu0.b32.cont [14/16] 0.0, 128
        %780 = vxpose.xlu0.b32.cont [15/16] 0.0, 128
        %781 = vxpose.xlu0.b32.end [16/16] 0.0, 128
        %v782 = vpop.trf.xlu0
        %v783 = vpop.trf.xlu0
        %v784 = vpop.trf.xlu0
        %v785 = vpop.trf.xlu0
        %v786 = vpop.trf.xlu0
        %v787 = vpop.trf.xlu0
        %v788 = vpop.trf.xlu0
        %v789 = vpop.trf.xlu0
        %v790 = vpop.trf.xlu0
        %v791 = vpop.trf.xlu0
        %v792 = vpop.trf.xlu0
        %v793 = vpop.trf.xlu0
        %v794 = vpop.trf.xlu0
        %v795 = vpop.trf.xlu0
        %v796 = vpop.trf.xlu0
        %v797 = vpop.trf.xlu0
        %798 = vset.pattern.permute.xlu0 33
        %799 = vperm.xlu0 %798, %v753
        %v800 = vpop.permute.xlu0 %799
        %802 = vset.pattern.permute.xlu0 33
        %803 = vperm.xlu0 %802, %v756
        %v804 = vpop.permute.xlu0 %803
        %v806 = vperm.slane %v782, 0
        %v807 = vadd.f32 %v800, %v806
        %v808 = vadd.f32 %v804, %v806
        %809 = vrot.lane.b32.xlu0 %v753, 94
        %v810 = vpop.permute.xlu0 %809
        %811 = vrot.lane.b32.xlu0 %v756, 94
        %v812 = vpop.permute.xlu0 %811
        %815 = vxpose.xlu0.b32.start [1/16] %v810, 128
        %816 = vxpose.xlu0.b32.cont [2/16] %v812, 128
        %817 = vxpose.xlu0.b32.cont [3/16] 0.0, 128
        %818 = vxpose.xlu0.b32.cont [4/16] 0.0, 128
        %819 = vxpose.xlu0.b32.cont [5/16] 0.0, 128
        %820 = vxpose.xlu0.b32.cont [6/16] 0.0, 128
        %821 = vxpose.xlu0.b32.cont [7/16] 0.0, 128
        %822 = vxpose.xlu0.b32.cont [8/16] 0.0, 128
        %823 = vxpose.xlu0.b32.cont [9/16] 0.0, 128
        %824 = vxpose.xlu0.b32.cont [10/16] 0.0, 128
        %825 = vxpose.xlu0.b32.cont [11/16] 0.0, 128
        %826 = vxpose.xlu0.b32.cont [12/16] 0.0, 128
        %827 = vxpose.xlu0.b32.cont [13/16] 0.0, 128
        %828 = vxpose.xlu0.b32.cont [14/16] 0.0, 128
        %829 = vxpose.xlu0.b32.cont [15/16] 0.0, 128
        %830 = vxpose.xlu0.b32.end [16/16] 0.0, 128
        %v831 = vpop.trf.xlu0
        %v832 = vpop.trf.xlu0
        %v833 = vpop.trf.xlu0
        %v834 = vpop.trf.xlu0
        %v835 = vpop.trf.xlu0
        %v836 = vpop.trf.xlu0
        %v837 = vpop.trf.xlu0
        %v838 = vpop.trf.xlu0
        %v839 = vpop.trf.xlu0
        %v840 = vpop.trf.xlu0
        %v841 = vpop.trf.xlu0
        %v842 = vpop.trf.xlu0
        %v843 = vpop.trf.xlu0
        %v844 = vpop.trf.xlu0
        %v845 = vpop.trf.xlu0
        %v846 = vpop.trf.xlu0
        %847 = vset.pattern.permute.xlu0 35
        %848 = vperm.xlu0 %847, %v753
        %v849 = vpop.permute.xlu0 %848
        %851 = vset.pattern.permute.xlu0 35
        %852 = vperm.xlu0 %851, %v756
        %v853 = vpop.permute.xlu0 %852
        %v855 = vperm.slane %v831, 0
        %v856 = vadd.f32 %v849, %v855
        %v857 = vadd.f32 %v853, %v855
        %vm858 = vcmp.gt.f32.partialorder %v807, 0.0
        %vm859 = vcmp.gt.f32.partialorder %v808, 0.0
        %vm860 = vcmp.gt.f32.partialorder %v856, 0.0
        %vm861 = vcmp.gt.f32.partialorder %v857, 0.0
        %v862 = vmul.f32 %v807, 0.2
        %v863 = vmul.f32 %v808, 0.2
        %v864 = vmul.f32 %v856, 0.2
        %v865 = vmul.f32 %v857, 0.2
        %v866 = vsel %vm858, %v807, %v862
        %v867 = vsel %vm859, %v808, %v863
        %v868 = vsel %vm860, %v856, %v864
        %v869 = vsel %vm861, %v857, %v865
        %v870 = vadd.f32 %v866, %v422
        %v871 = vadd.f32 %v867, %v423
        %v872 = vadd.f32 %v868, %v424
        %v873 = vadd.f32 %v869, %v425
        %v874 = vsel %vm575, %v870, -inf
        %875 = vmax.xlane.f32.xlu0 %v874
        %v876 = vpop.xlane.xlu0 %875
        %v877 = vsel %vm575, %v871, -inf
        %878 = vmax.xlane.f32.xlu0 %v877
        %v879 = vpop.xlane.xlu0 %878
        %v880 = vsel %vm575, %v872, -inf
        %881 = vmax.xlane.f32.xlu0 %v880
        %v882 = vpop.xlane.xlu0 %881
        %v883 = vsel %vm575, %v873, -inf
        %884 = vmax.xlane.f32.xlu0 %v883
        %v885 = vpop.xlane.xlu0 %884
        %v886 = vsub.f32 %v870, %v876
        %v887 = vsub.f32 %v871, %v879
        %v888 = vsub.f32 %v872, %v882
        %v889 = vsub.f32 %v873, %v885
        %v890 = vmul.f32 %v886, 1.442695
        %v891 = vpow.pop %v890
        %v892 = vmul.f32 %v887, 1.442695
        %v893 = vpow.pop %v892
        %v894 = vmul.f32 %v888, 1.442695
        %v895 = vpow.pop %v894
        %v896 = vmul.f32 %v889, 1.442695
        %v897 = vpow.pop %v896
        %v898 = vsel %vm575, %v891, 0.0
        %899 = vadd.xlane.f32.xlu0 %v898
        %v900 = vpop.xlane.xlu0 %899
        %v901 = vsel %vm575, %v893, 0.0
        %902 = vadd.xlane.f32.xlu0 %v901
        %v903 = vpop.xlane.xlu0 %902
        %v904 = vsel %vm575, %v895, 0.0
        %905 = vadd.xlane.f32.xlu0 %v904
        %v906 = vpop.xlane.xlu0 %905
        %v907 = vsel %vm575, %v897, 0.0
        %908 = vadd.xlane.f32.xlu0 %v907
        %v909 = vpop.xlane.xlu0 %908
        %v910 = vrcp.pop %v900
        %v911 = vmul.f32 %v900, %v910
        %v912 = vsub.f32 1.0, %v911
        %v913 = vmul.f32 %v910, %v912
        %v914 = vadd.f32 %v910, %v913
        %vm915 = vweird.f32 %v900
        %vm916 = vweird.f32 %v910
        %vm917 = vmor %vm915, %vm916
        %v918 = vsel %vm917, %v910, %v914
        %v919 = vand.u32 2147483647, %v900
        %vm920 = vcmp.eq.f32.partialorder %v919, 8.507059e+37
        %v921 = vand.u32 %v900, 2147483648
        %v922 = vor.u32 1.1754944e-38, %v921
        %v923 = vsel %vm920, %v922, %v918
        %v924 = vrcp.pop %v903
        %v925 = vmul.f32 %v903, %v924
        %v926 = vsub.f32 1.0, %v925
        %v927 = vmul.f32 %v924, %v926
        %v928 = vadd.f32 %v924, %v927
        %vm929 = vweird.f32 %v903
        %vm930 = vweird.f32 %v924
        %vm931 = vmor %vm929, %vm930
        %v932 = vsel %vm931, %v924, %v928
        %v933 = vand.u32 2147483647, %v903
        %vm934 = vcmp.eq.f32.partialorder %v933, 8.507059e+37
        %v935 = vand.u32 %v903, 2147483648
        %v936 = vor.u32 1.1754944e-38, %v935
        %v937 = vsel %vm934, %v936, %v932
        %v938 = vrcp.pop %v906
        %v939 = vmul.f32 %v906, %v938
        %v940 = vsub.f32 1.0, %v939
        %v941 = vmul.f32 %v938, %v940
        %v942 = vadd.f32 %v938, %v941
        %vm943 = vweird.f32 %v906
        %vm944 = vweird.f32 %v938
        %vm945 = vmor %vm943, %vm944
        %v946 = vsel %vm945, %v938, %v942
        %v947 = vand.u32 2147483647, %v906
        %vm948 = vcmp.eq.f32.partialorder %v947, 8.507059e+37
        %v949 = vand.u32 %v906, 2147483648
        %v950 = vor.u32 1.1754944e-38, %v949
        %v951 = vsel %vm948, %v950, %v946
        %v952 = vrcp.pop %v909
        %v953 = vmul.f32 %v909, %v952
        %v954 = vsub.f32 1.0, %v953
        %v955 = vmul.f32 %v952, %v954
        %v956 = vadd.f32 %v952, %v955
        %vm957 = vweird.f32 %v909
        %vm958 = vweird.f32 %v952
        %vm959 = vmor %vm957, %vm958
        %v960 = vsel %vm959, %v952, %v956
        %v961 = vand.u32 2147483647, %v909
        %vm962 = vcmp.eq.f32.partialorder %v961, 8.507059e+37
        %v963 = vand.u32 %v909, 2147483648
        %v964 = vor.u32 1.1754944e-38, %v963
        %v965 = vsel %vm962, %v964, %v960
        %v966 = vmul.f32 %v891, %v923
        %v967 = vmul.f32 %v893, %v937
        %v968 = vmul.f32 %v895, %v951
        %v969 = vmul.f32 %v897, %v965
        %v971 = vsel %vm575, %v966, 0
        %v974 = vsel %vm575, %v967, 0
        %v977 = vsel %vm575, %v968, 0
        %v980 = vsel %vm575, %v969, 0
        %982 = vmatpush.msra.mxu0 0.0
        %983 = vmatpush.msra.mxu0 0.0
        %984 = vmatpush.msra.mxu0 0.0
        %985 = vmatpush.msra.mxu0 0.0
        %986 = vmatpush.msra.mxu0 0.0
        %987 = vmatpush.msra.mxu0 0.0
        %988 = vmatpush.msra.mxu0 0.0
        %989 = vmatpush.msra.mxu0 0.0
        %990 = vmatpush.msra.mxu0 0.0
        %991 = vmatpush.msra.mxu0 0.0
        %992 = vmatpush.msra.mxu0 0.0
        %993 = vmatpush.msra.mxu0 0.0
        %994 = vmatpush.msra.mxu0 0.0
        %995 = vmatpush.msra.mxu0 0.0
        %996 = vmatpush.msra.mxu0 %v756
        %997 = vmatpush.msra.mxu0 %v753
        %998 = vmatmul.f32.gmra.mxu0 %v971
        %v999 = vpop.f32.mrf.mxu0
        %v1000 = vadd.f32 0.0, %v999
        %1001 = vmatmul.f32.gmra.mxu0 %v974
        %v1002 = vpop.f32.mrf.mxu0
        %v1003 = vadd.f32 0.0, %v1002
        %1004 = vmatmul.f32.gmra.mxu0 %v977
        %v1005 = vpop.f32.mrf.mxu0
        %v1006 = vadd.f32 0.0, %v1005
        %1007 = vmatmul.f32.gmra.mxu0 %v980
        %v1008 = vpop.f32.mrf.mxu0
        %v1009 = vadd.f32 0.0, %v1008
        %1010 = vdwg.mxu0
        %v1011 = vsel %vm715, %v1000, %v1006
        %v1012 = vsel %vm715, %v1003, %v1009
        %v1013 = vld [vmem:[%s6] sm:$0x1]
        %v1015 = vperm.slane %v1013, 0
        %v1017 = vadd.f32 %v1011, %v1015
        %v1018 = vadd.f32 %v1012, %v1015
        %v1019 = vmax.f32 %v1017, 0.0
        %v1020 = vmax.f32 %v1018, 0.0
        %v1021 = vld [vmem:[%s7] sm:$0xff]
        %v1022 = vld [vmem:[%s7 + $0x8] sm:$0xff]
        %v1023 = vld [vmem:[%s7 + $0x10] sm:$0xff]
        %v1024 = vld [vmem:[%s7 + $0x18] sm:$0xff]
        %v1026 = vsel %vm728, %v1019, 0
        %v1029 = vsel %vm728, %v1020, 0
        %1031 = vmatpush.msra.mxu0 0.0
        %1032 = vmatpush.msra.mxu0 0.0
        %1033 = vmatpush.msra.mxu0 0.0
        %1034 = vmatpush.msra.mxu0 0.0
        %1035 = vmatpush.msra.mxu0 0.0
        %1036 = vmatpush.msra.mxu0 0.0
        %1037 = vmatpush.msra.mxu0 0.0
        %1038 = vmatpush.msra.mxu0 0.0
        %1039 = vmatpush.msra.mxu0 0.0
        %1040 = vmatpush.msra.mxu0 0.0
        %1041 = vmatpush.msra.mxu0 0.0
        %1042 = vmatpush.msra.mxu0 0.0
        %1043 = vmatpush.msra.mxu0 %v1024
        %1044 = vmatpush.msra.mxu0 %v1023
        %1045 = vmatpush.msra.mxu0 %v1022
        %1046 = vmatpush.msra.mxu0 %v1021
        %1047 = vmatmul.f32.gmra.mxu0 %v1026
        %v1048 = vpop.f32.mrf.mxu0
        %v1049 = vadd.f32 0.0, %v1048
        %1050 = vmatmul.f32.gmra.mxu0 %v1029
        %v1051 = vpop.f32.mrf.mxu0
        %v1052 = vadd.f32 0.0, %v1051
        %1053 = vdwg.mxu0
        %1056 = vrot.lane.b32.xlu0 %v1049, 64
        %v1057 = vpop.permute.xlu0 %1056
        %1058 = vrot.lane.b32.xlu0 %v1052, 64
        %v1059 = vpop.permute.xlu0 %1058
        %1062 = vxpose.xlu0.b32.start [1/16] %v1057, 128
        %1063 = vxpose.xlu0.b32.cont [2/16] %v1059, 128
        %1064 = vxpose.xlu0.b32.cont [3/16] 0.0, 128
        %1065 = vxpose.xlu0.b32.cont [4/16] 0.0, 128
        %1066 = vxpose.xlu0.b32.cont [5/16] 0.0, 128
        %1067 = vxpose.xlu0.b32.cont [6/16] 0.0, 128
        %1068 = vxpose.xlu0.b32.cont [7/16] 0.0, 128
        %1069 = vxpose.xlu0.b32.cont [8/16] 0.0, 128
        %1070 = vxpose.xlu0.b32.cont [9/16] 0.0, 128
        %1071 = vxpose.xlu0.b32.cont [10/16] 0.0, 128
        %1072 = vxpose.xlu0.b32.cont [11/16] 0.0, 128
        %1073 = vxpose.xlu0.b32.cont [12/16] 0.0, 128
        %1074 = vxpose.xlu0.b32.cont [13/16] 0.0, 128
        %1075 = vxpose.xlu0.b32.cont [14/16] 0.0, 128
        %1076 = vxpose.xlu0.b32.cont [15/16] 0.0, 128
        %1077 = vxpose.xlu0.b32.end [16/16] 0.0, 128
        %v1078 = vpop.trf.xlu0
        %v1079 = vpop.trf.xlu0
        %v1080 = vpop.trf.xlu0
        %v1081 = vpop.trf.xlu0
        %v1082 = vpop.trf.xlu0
        %v1083 = vpop.trf.xlu0
        %v1084 = vpop.trf.xlu0
        %v1085 = vpop.trf.xlu0
        %v1086 = vpop.trf.xlu0
        %v1087 = vpop.trf.xlu0
        %v1088 = vpop.trf.xlu0
        %v1089 = vpop.trf.xlu0
        %v1090 = vpop.trf.xlu0
        %v1091 = vpop.trf.xlu0
        %v1092 = vpop.trf.xlu0
        %v1093 = vpop.trf.xlu0
        %1094 = vset.pattern.permute.xlu0 65
        %1095 = vperm.xlu0 %1094, %v1049
        %v1096 = vpop.permute.xlu0 %1095
        %1098 = vset.pattern.permute.xlu0 65
        %1099 = vperm.xlu0 %1098, %v1052
        %v1100 = vpop.permute.xlu0 %1099
        %v1102 = vperm.slane %v1078, 0
        %v1103 = vadd.f32 %v1096, %v1102
        %v1104 = vadd.f32 %v1100, %v1102
        %1105 = vrot.lane.b32.xlu0 %v1049, 62
        %v1106 = vpop.permute.xlu0 %1105
        %1107 = vrot.lane.b32.xlu0 %v1052, 62
        %v1108 = vpop.permute.xlu0 %1107
        %1111 = vxpose.xlu0.b32.start [1/16] %v1106, 128
        %1112 = vxpose.xlu0.b32.cont [2/16] %v1108, 128
        %1113 = vxpose.xlu0.b32.cont [3/16] 0.0, 128
        %1114 = vxpose.xlu0.b32.cont [4/16] 0.0, 128
        %1115 = vxpose.xlu0.b32.cont [5/16] 0.0, 128
        %1116 = vxpose.xlu0.b32.cont [6/16] 0.0, 128
        %1117 = vxpose.xlu0.b32.cont [7/16] 0.0, 128
        %1118 = vxpose.xlu0.b32.cont [8/16] 0.0, 128
        %1119 = vxpose.xlu0.b32.cont [9/16] 0.0, 128
        %1120 = vxpose.xlu0.b32.cont [10/16] 0.0, 128
        %1121 = vxpose.xlu0.b32.cont [11/16] 0.0, 128
        %1122 = vxpose.xlu0.b32.cont [12/16] 0.0, 128
        %1123 = vxpose.xlu0.b32.cont [13/16] 0.0, 128
        %1124 = vxpose.xlu0.b32.cont [14/16] 0.0, 128
        %1125 = vxpose.xlu0.b32.cont [15/16] 0.0, 128
        %1126 = vxpose.xlu0.b32.end [16/16] 0.0, 128
        %v1127 = vpop.trf.xlu0
        %v1128 = vpop.trf.xlu0
        %v1129 = vpop.trf.xlu0
        %v1130 = vpop.trf.xlu0
        %v1131 = vpop.trf.xlu0
        %v1132 = vpop.trf.xlu0
        %v1133 = vpop.trf.xlu0
        %v1134 = vpop.trf.xlu0
        %v1135 = vpop.trf.xlu0
        %v1136 = vpop.trf.xlu0
        %v1137 = vpop.trf.xlu0
        %v1138 = vpop.trf.xlu0
        %v1139 = vpop.trf.xlu0
        %v1140 = vpop.trf.xlu0
        %v1141 = vpop.trf.xlu0
        %v1142 = vpop.trf.xlu0
        %1143 = vset.pattern.permute.xlu0 67
        %1144 = vperm.xlu0 %1143, %v1049
        %v1145 = vpop.permute.xlu0 %1144
        %1147 = vset.pattern.permute.xlu0 67
        %1148 = vperm.xlu0 %1147, %v1052
        %v1149 = vpop.permute.xlu0 %1148
        %v1151 = vperm.slane %v1127, 0
        %v1152 = vadd.f32 %v1145, %v1151
        %v1153 = vadd.f32 %v1149, %v1151
        %vm1154 = vcmp.gt.f32.partialorder %v1103, 0.0
        %vm1155 = vcmp.gt.f32.partialorder %v1104, 0.0
        %vm1156 = vcmp.gt.f32.partialorder %v1152, 0.0
        %vm1157 = vcmp.gt.f32.partialorder %v1153, 0.0
        %v1158 = vmul.f32 %v1103, 0.2
        %v1159 = vmul.f32 %v1104, 0.2
        %v1160 = vmul.f32 %v1152, 0.2
        %v1161 = vmul.f32 %v1153, 0.2
        %v1162 = vsel %vm1154, %v1103, %v1158
        %v1163 = vsel %vm1155, %v1104, %v1159
        %v1164 = vsel %vm1156, %v1152, %v1160
        %v1165 = vsel %vm1157, %v1153, %v1161
        %v1166 = vadd.f32 %v1162, %v422
        %v1167 = vadd.f32 %v1163, %v423
        %v1168 = vadd.f32 %v1164, %v424
        %v1169 = vadd.f32 %v1165, %v425
        %v1170 = vsel %vm575, %v1166, -inf
        %1171 = vmax.xlane.f32.xlu0 %v1170
        %v1172 = vpop.xlane.xlu0 %1171
        %v1173 = vsel %vm575, %v1167, -inf
        %1174 = vmax.xlane.f32.xlu0 %v1173
        %v1175 = vpop.xlane.xlu0 %1174
        %v1176 = vsel %vm575, %v1168, -inf
        %1177 = vmax.xlane.f32.xlu0 %v1176
        %v1178 = vpop.xlane.xlu0 %1177
        %v1179 = vsel %vm575, %v1169, -inf
        %1180 = vmax.xlane.f32.xlu0 %v1179
        %v1181 = vpop.xlane.xlu0 %1180
        %v1182 = vsub.f32 %v1166, %v1172
        %v1183 = vsub.f32 %v1167, %v1175
        %v1184 = vsub.f32 %v1168, %v1178
        %v1185 = vsub.f32 %v1169, %v1181
        %v1186 = vmul.f32 %v1182, 1.442695
        %v1187 = vpow.pop %v1186
        %v1188 = vmul.f32 %v1183, 1.442695
        %v1189 = vpow.pop %v1188
        %v1190 = vmul.f32 %v1184, 1.442695
        %v1191 = vpow.pop %v1190
        %v1192 = vmul.f32 %v1185, 1.442695
        %v1193 = vpow.pop %v1192
        %v1194 = vsel %vm575, %v1187, 0.0
        %1195 = vadd.xlane.f32.xlu0 %v1194
        %v1196 = vpop.xlane.xlu0 %1195
        %v1197 = vsel %vm575, %v1189, 0.0
        %1198 = vadd.xlane.f32.xlu0 %v1197
        %v1199 = vpop.xlane.xlu0 %1198
        %v1200 = vsel %vm575, %v1191, 0.0
        %1201 = vadd.xlane.f32.xlu0 %v1200
        %v1202 = vpop.xlane.xlu0 %1201
        %v1203 = vsel %vm575, %v1193, 0.0
        %1204 = vadd.xlane.f32.xlu0 %v1203
        %v1205 = vpop.xlane.xlu0 %1204
        %v1206 = vrcp.pop %v1196
        %v1207 = vmul.f32 %v1196, %v1206
        %v1208 = vsub.f32 1.0, %v1207
        %v1209 = vmul.f32 %v1206, %v1208
        %v1210 = vadd.f32 %v1206, %v1209
        %vm1211 = vweird.f32 %v1196
        %vm1212 = vweird.f32 %v1206
        %vm1213 = vmor %vm1211, %vm1212
        %v1214 = vsel %vm1213, %v1206, %v1210
        %v1215 = vand.u32 2147483647, %v1196
        %vm1216 = vcmp.eq.f32.partialorder %v1215, 8.507059e+37
        %v1217 = vand.u32 %v1196, 2147483648
        %v1218 = vor.u32 1.1754944e-38, %v1217
        %v1219 = vsel %vm1216, %v1218, %v1214
        %v1220 = vrcp.pop %v1199
        %v1221 = vmul.f32 %v1199, %v1220
        %v1222 = vsub.f32 1.0, %v1221
        %v1223 = vmul.f32 %v1220, %v1222
        %v1224 = vadd.f32 %v1220, %v1223
        %vm1225 = vweird.f32 %v1199
        %vm1226 = vweird.f32 %v1220
        %vm1227 = vmor %vm1225, %vm1226
        %v1228 = vsel %vm1227, %v1220, %v1224
        %v1229 = vand.u32 2147483647, %v1199
        %vm1230 = vcmp.eq.f32.partialorder %v1229, 8.507059e+37
        %v1231 = vand.u32 %v1199, 2147483648
        %v1232 = vor.u32 1.1754944e-38, %v1231
        %v1233 = vsel %vm1230, %v1232, %v1228
        %v1234 = vrcp.pop %v1202
        %v1235 = vmul.f32 %v1202, %v1234
        %v1236 = vsub.f32 1.0, %v1235
        %v1237 = vmul.f32 %v1234, %v1236
        %v1238 = vadd.f32 %v1234, %v1237
        %vm1239 = vweird.f32 %v1202
        %vm1240 = vweird.f32 %v1234
        %vm1241 = vmor %vm1239, %vm1240
        %v1242 = vsel %vm1241, %v1234, %v1238
        %v1243 = vand.u32 2147483647, %v1202
        %vm1244 = vcmp.eq.f32.partialorder %v1243, 8.507059e+37
        %v1245 = vand.u32 %v1202, 2147483648
        %v1246 = vor.u32 1.1754944e-38, %v1245
        %v1247 = vsel %vm1244, %v1246, %v1242
        %v1248 = vrcp.pop %v1205
        %v1249 = vmul.f32 %v1205, %v1248
        %v1250 = vsub.f32 1.0, %v1249
        %v1251 = vmul.f32 %v1248, %v1250
        %v1252 = vadd.f32 %v1248, %v1251
        %vm1253 = vweird.f32 %v1205
        %vm1254 = vweird.f32 %v1248
        %vm1255 = vmor %vm1253, %vm1254
        %v1256 = vsel %vm1255, %v1248, %v1252
        %v1257 = vand.u32 2147483647, %v1205
        %vm1258 = vcmp.eq.f32.partialorder %v1257, 8.507059e+37
        %v1259 = vand.u32 %v1205, 2147483648
        %v1260 = vor.u32 1.1754944e-38, %v1259
        %v1261 = vsel %vm1258, %v1260, %v1256
        %v1262 = vmul.f32 %v1187, %v1219
        %v1263 = vmul.f32 %v1189, %v1233
        %v1264 = vmul.f32 %v1191, %v1247
        %v1265 = vmul.f32 %v1193, %v1261
        %v1267 = vsel %vm575, %v1262, 0
        %v1270 = vsel %vm575, %v1263, 0
        %v1273 = vsel %vm575, %v1264, 0
        %v1276 = vsel %vm575, %v1265, 0
        %1278 = vmatpush.msra.mxu0 0.0
        %1279 = vmatpush.msra.mxu0 0.0
        %1280 = vmatpush.msra.mxu0 0.0
        %1281 = vmatpush.msra.mxu0 0.0
        %1282 = vmatpush.msra.mxu0 0.0
        %1283 = vmatpush.msra.mxu0 0.0
        %1284 = vmatpush.msra.mxu0 0.0
        %1285 = vmatpush.msra.mxu0 0.0
        %1286 = vmatpush.msra.mxu0 0.0
        %1287 = vmatpush.msra.mxu0 0.0
        %1288 = vmatpush.msra.mxu0 0.0
        %1289 = vmatpush.msra.mxu0 0.0
        %1290 = vmatpush.msra.mxu0 0.0
        %1291 = vmatpush.msra.mxu0 0.0
        %1292 = vmatpush.msra.mxu0 %v1052
        %1293 = vmatpush.msra.mxu0 %v1049
        %1294 = vmatmul.f32.gmra.mxu0 %v1267
        %v1295 = vpop.f32.mrf.mxu0
        %v1296 = vadd.f32 0.0, %v1295
        %1297 = vmatmul.f32.gmra.mxu0 %v1270
        %v1298 = vpop.f32.mrf.mxu0
        %v1299 = vadd.f32 0.0, %v1298
        %1300 = vmatmul.f32.gmra.mxu0 %v1273
        %v1301 = vpop.f32.mrf.mxu0
        %v1302 = vadd.f32 0.0, %v1301
        %1303 = vmatmul.f32.gmra.mxu0 %v1276
        %v1304 = vpop.f32.mrf.mxu0
        %v1305 = vadd.f32 0.0, %v1304
        %1306 = vdwg.mxu0
        %vm1307 = vcmp.lt.s32.totalorder %v714, 32
        %v1308 = vsel %vm1307, %v1296, %v1302
        %v1309 = vsel %vm1307, %v1299, %v1305
        %v1310 = vld [vmem:[%s8] sm:$0x1]
        %v1312 = vperm.slane %v1310, 0
        %v1314 = vadd.f32 %v1308, %v1312
        %v1315 = vadd.f32 %v1309, %v1312
        %v1316 = vmax.f32 %v1314, 0.0
        %v1317 = vmax.f32 %v1315, 0.0
        %v1318 = vld [vmem:[%s9] sm:$0xff]
        %v1319 = vld [vmem:[%s9 + $0x8] sm:$0xff]
        %v1320 = vld [vmem:[%s9 + $0x10] sm:$0xff]
        %v1321 = vld [vmem:[%s9 + $0x18] sm:$0xff]
        %v1322 = vld [vmem:[%s9 + $0x20] sm:$0xff]
        %v1323 = vld [vmem:[%s9 + $0x28] sm:$0xff]
        %v1324 = vld [vmem:[%s9 + $0x30] sm:$0xff]
        %v1325 = vld [vmem:[%s9 + $0x38] sm:$0xff]
        %v1326 = vld [vmem:[%s10] sm:$0x1]
        %v1328 = vperm.slane %v1326, 0
        %vm1330 = vcmask 523264
        %v1332 = vsel %vm1330, %v1316, 0
        %v1335 = vsel %vm1330, %v1317, 0
        %1337 = vmatpush.msra.mxu0 0.0
        %1338 = vmatpush.msra.mxu0 0.0
        %1339 = vmatpush.msra.mxu0 0.0
        %1340 = vmatpush.msra.mxu0 0.0
        %1341 = vmatpush.msra.mxu0 0.0
        %1342 = vmatpush.msra.mxu0 0.0
        %1343 = vmatpush.msra.mxu0 0.0
        %1344 = vmatpush.msra.mxu0 0.0
        %1345 = vmatpush.msra.mxu0 %v1325
        %1346 = vmatpush.msra.mxu0 %v1324
        %1347 = vmatpush.msra.mxu0 %v1323
        %1348 = vmatpush.msra.mxu0 %v1322
        %1349 = vmatpush.msra.mxu0 %v1321
        %1350 = vmatpush.msra.mxu0 %v1320
        %1351 = vmatpush.msra.mxu0 %v1319
        %1352 = vmatpush.msra.mxu0 %v1318
        %1353 = vmatmul.f32.gmra.mxu0 %v1332
        %v1354 = vpop.f32.mrf.mxu0
        %v1355 = vadd.f32 %v1328, %v1354
        %1356 = vmatmul.f32.gmra.mxu0 %v1335
        %v1357 = vpop.f32.mrf.mxu0
        %v1358 = vadd.f32 %v1328, %v1357
        %1359 = vdwg.mxu0
        %v1360 = vld [vmem:[%s421] sm:$0x3]
        %vm1361 = vcmask 123904
        %v1362 = vsel %vm1361, %v1360, 0.0
        %1363 = vadd.xlane.f32.xlu0 %v1362
        %v1364 = vpop.xlane.xlu0 %1363
        %v1365 = vmax.f32 %v1364, 1.0
        %v1367 = vsel %vm575, %v1360, 0
        %1369 = vmatpush.msra.mxu0 0.0
        %1370 = vmatpush.msra.mxu0 0.0
        %1371 = vmatpush.msra.mxu0 0.0
        %1372 = vmatpush.msra.mxu0 0.0
        %1373 = vmatpush.msra.mxu0 0.0
        %1374 = vmatpush.msra.mxu0 0.0
        %1375 = vmatpush.msra.mxu0 0.0
        %1376 = vmatpush.msra.mxu0 0.0
        %1377 = vmatpush.msra.mxu0 0.0
        %1378 = vmatpush.msra.mxu0 0.0
        %1379 = vmatpush.msra.mxu0 0.0
        %1380 = vmatpush.msra.mxu0 0.0
        %1381 = vmatpush.msra.mxu0 0.0
        %1382 = vmatpush.msra.mxu0 0.0
        %1383 = vmatpush.msra.mxu0 %v1358
        %1384 = vmatpush.msra.mxu0 %v1355
        %1385 = vmatmul.f32.gmra.mxu0 %v1367
        %v1386 = vpop.f32.mrf.mxu0
        %v1387 = vadd.f32 0.0, %v1386
        %1388 = vdwg.mxu0
        %v1389 = vrcp.pop %v1365
        %v1390 = vmul.f32 %v1365, %v1389
        %v1391 = vsub.f32 1.0, %v1390
        %v1392 = vmul.f32 %v1389, %v1391
        %v1393 = vadd.f32 %v1389, %v1392
        %vm1394 = vweird.f32 %v1365
        %vm1395 = vweird.f32 %v1389
        %vm1396 = vmor %vm1394, %vm1395
        %v1397 = vsel %vm1396, %v1389, %v1393
        %v1398 = vand.u32 2147483647, %v1365
        %vm1399 = vcmp.eq.f32.partialorder %v1398, 8.507059e+37
        %v1400 = vand.u32 %v1365, 2147483648
        %v1401 = vor.u32 1.1754944e-38, %v1400
        %v1402 = vsel %vm1399, %v1401, %v1397
        %v1403 = vmul.f32 %v1387, %v1402
        %vm1404 = vcmask 254976
        %1405 = vst.msk [vmem:[%s407] sm:$0x3] %vm1404, %v1403
        %s1406 = sand.u32 %s279, 1
        %s1407 = scalar_lea.sflag [#allocation3], %s1406
        %s1408 = sand.u32 %s279, 1
        %s1409 = smul.addr %s1408, 2
        %s1410 = scalar_lea.vmem [#allocation2], %s1409
        // Predicated region
        $region65: #{tpu_custom_call.1} parent=63 // pred_check
          %p1411 = pneg %p289
        $region66: #{tpu_custom_call.1} parent=63 // pred_check_branch
          %1413 = sbr.rel (%p1411) target = $region68
        $region67: #{tpu_custom_call.1} parent=63 // pred_region
          %1415 = vsyncadd %s1407, 0
          %s1416 = smul.addr %s25, 2
          %s1417 = scalar_lea.hbm %s11, %s1416
          %s1419 = sshll.u32 %s1410, 4
          %s1420 = int_to_ptr.vmem [resolvable:$true] %s1419
          %s1421 = sshll.u32 %s1417, 4
          %s1422 = int_to_ptr.hbm [resolvable:$true] %s1421
          %1424 = dma.vmem_to_hbm [thread:$0]  %s1420, 32, %s1422, %s1407
        $region68: #{tpu_custom_call.1} parent=63 // pred_fallthru
          _
      $region64: #{tpu_custom_call.1} parent=5 // pred_fallthru
        _
      %p1425 = scmp.le.s32.totalorder 2, %s20
      // Predicated region
      $region69: #{tpu_custom_call.1} parent=5 // pred_check
        %p1426 = pneg %p1425
      $region70: #{tpu_custom_call.1} parent=5 // pred_check_branch
        %1428 = sbr.rel (%p1426) target = $region72
      $region71: #{tpu_custom_call.1} parent=5 // pred_region
        %s1429 = ssub.s32 %s20, 2
        // Predicated region
        $region73: #{tpu_custom_call.1} parent=71 // pred_check
          %p1430 = pneg %p295
        $region74: #{tpu_custom_call.1} parent=71 // pred_check_branch
          %1432 = sbr.rel (%p1430) target = $region76
        $region75: #{tpu_custom_call.1} parent=71 // pred_region
          %s1433 = sand.u32 %s280, 1
          %s1434 = scalar_lea.sflag [#allocation3], %s1433
          %s1435 = sand.u32 %s280, 1
          %s1436 = smul.addr %s1435, 2
          %s1437 = scalar_lea.vmem [#allocation2], %s1436
          %1439 = dma.done %s1434, 32
        $region76: #{tpu_custom_call.1} parent=71 // pred_fallthru
          _
      $region72: #{tpu_custom_call.1} parent=5 // pred_fallthru
        _
    $region6: #{tpu_custom_call.1} parent=1 // loop_footer
      %s24 = sadd.s32 1, %s20
    $region7: #{tpu_custom_call.1} parent=1 // loop_footer_branch
      %19 = sbr.rel target = $region3
    $region8: #{tpu_custom_call.1} parent=1 // loop_exit
      _
    %1440 = vsyncpa [#allocation3], 1
    %s1441 = scalar_lea.sflag [#allocation3], 1
    %1442 = vsyncpa %s1441, 1

</llo_original>
